<compile_context>
chip_gen: v6e
topology: v6e:2x2x1
jax: 0.10.0
libtpu: 0.0.40
codegen_flags: <defaults>
</compile_context>

<pallas_src>
import jax
import jax.numpy as jnp
from jax.experimental import pallas as pl
from jax.experimental.pallas import tpu as pltpu


def _tokenizer_kernel(x_ref, w1_ref, s1_ref, w2_ref, b2_ref, tok_ref, flat_ref):
    nb = x_ref.shape[0]
    for n in range(nb):                       # static unroll over the batch sub-block
        # on-chip transpose (C, HW) -> (HW, C); reused for both matmuls and
        # emitted directly as the "flattened, permuted input" output.
        xt = x_ref[n].T
        flat_ref[n] = xt

        # 1x1 conv #1 with BatchNorm (eval) and bias folded into (W1', shift'),
        # followed by SiLU.
        a = jnp.dot(xt, w1_ref[...], preferred_element_type=jnp.float32) + s1_ref[...]
        a = a * jax.nn.sigmoid(a)

        # 1x1 conv #2 -> spatial attention logits (HW, L)
        s = jnp.dot(a, w2_ref[...], preferred_element_type=jnp.float32) + b2_ref[...]

        # softmax over the spatial (HW) axis, per attention map
        m = jnp.max(s, axis=0, keepdims=True)
        e = jnp.exp(s - m)
        p = e * pl.reciprocal(jnp.sum(e, axis=0, keepdims=True), approx=True)

        # visual tokens: contract over HW (leading axis of both operands)
        # without materializing p.T -> (L, C)
        tok = jax.lax.dot_general(p, xt, (((0,), (0,)), ((), ())),
                                  preferred_element_type=jnp.float32)
        tok_ref[n] = tok.astype(tok_ref.dtype)


def lfsa_tokenizer(x_nchw, w1, b1, bn_gamma, bn_beta, bn_mean, bn_var, w2, b2,
                   eps=1e-5, nb=None):
    """x_nchw: (N, C, H, W) float32.
    Returns (visual_tokens (N, L, C), flattened_permuted_input (N, HW, C))."""
    N, C, H, W = x_nchw.shape
    HW = H * W
    L = w1.shape[1]

    # pure reshape, no data movement: the kernel reads the native (N, C, HW) layout
    x_cn = x_nchw.reshape(N, C, HW)

    # fold eval-mode BatchNorm and the conv1 bias into the first matmul (trace time)
    scale = bn_gamma / jnp.sqrt(bn_var + eps)                  # (L,)
    w1_folded = w1 * scale[None, :]                            # (C, L)
    shift1 = (b1 * scale + bn_beta - bn_mean * scale).reshape(1, L)
    b2_2d = b2.reshape(1, L)

    # batch elements per grid step: amortize per-step overhead while keeping
    # >=2 grid steps when possible (so v7x can shard the parallel axis over 2 TCs)
    if nb is None:
        nb = N
        for cand in (8, 4, 2, 1):
            if N % cand == 0 and N // cand >= 2:
                nb = cand
                break
    assert N % nb == 0, "batch must be divisible by the per-step block"
    grid = (N // nb,)

    param = lambda shape: pl.BlockSpec(shape, lambda i: (0, 0))

    tokens, flat = pl.pallas_call(
        _tokenizer_kernel,
        out_shape=(jax.ShapeDtypeStruct((N, L, C), x_nchw.dtype),
                   jax.ShapeDtypeStruct((N, HW, C), x_nchw.dtype)),
        grid_spec=pltpu.PrefetchScalarGridSpec(
            num_scalar_prefetch=0,
            grid=grid,
            in_specs=[
                pl.BlockSpec((nb, C, HW), lambda i: (i, 0, 0)),   # x (NCHW, flattened)
                param((C, L)),                                    # folded conv1 weight
                param((1, L)),                                    # folded BN/bias shift
                param((L, L)),                                    # conv2 weight
                param((1, L)),                                    # conv2 bias
            ],
            out_specs=(
                pl.BlockSpec((nb, L, C), lambda i: (i, 0, 0)),    # visual tokens
                pl.BlockSpec((nb, HW, C), lambda i: (i, 0, 0)),   # flattened, permuted x
            ),
        ),
        compiler_params=pltpu.CompilerParams(
            dimension_semantics=("parallel",),
            vmem_limit_bytes=64 * 1024 * 1024),
    )(x_cn, w1_folded, shift1, w2, b2_2d)

    return tokens, flat


def _reference(x_nchw, w1, b1, g, be, mu, var, w2, b2, eps=1e-5):
    # pure-JAX reference mirroring the PyTorch module (BN in eval mode)
    N, C, H, W = x_nchw.shape
    HW = H * W
    x_flat = jnp.transpose(x_nchw.reshape(N, C, HW), (0, 2, 1))     # (N,HW,C)
    a = jnp.einsum("nsc,cl->nsl", x_flat, w1) + b1
    a = (a - mu) / jnp.sqrt(var + eps) * g + be
    a = a * jax.nn.sigmoid(a)
    s = jnp.einsum("nsl,lm->nsm", a, w2) + b2                       # (N,HW,L)
    p = jax.nn.softmax(s, axis=1)                                   # softmax over HW
    tok = jnp.einsum("nsl,nsc->nlc", p, x_flat)                     # (N,L,C)
    return tok, x_flat


if __name__ == "__main__":
    # small, lane-friendly shapes: C = 128 (lane-dense stores), HW = 8*16 = 128
    N, C, H, W = 4, 128, 8, 16
    L = 8

    key = jax.random.PRNGKey(0)
    ks = jax.random.split(key, 8)
    x = jax.random.normal(ks[0], (N, C, H, W), dtype=jnp.float32)

    # deterministic parameter init (shapes implied by the module __init__)
    w1 = jax.random.normal(ks[1], (C, L), dtype=jnp.float32) * 0.1   # conv1 weight (C->L)
    b1 = jax.random.normal(ks[2], (L,), dtype=jnp.float32) * 0.1
    bn_gamma = jnp.ones((L,), jnp.float32) + 0.1 * jax.random.normal(ks[3], (L,))
    bn_beta = 0.1 * jax.random.normal(ks[4], (L,))
    bn_mean = 0.1 * jax.random.normal(ks[5], (L,))
    bn_var = jnp.abs(jax.random.normal(ks[6], (L,))) + 0.5
    w2 = jax.random.normal(ks[7], (L, L), dtype=jnp.float32) * 0.1   # conv2 weight (L->L)
    b2 = jnp.zeros((L,), jnp.float32)

    tokens, flat = lfsa_tokenizer(x, w1, b1, bn_gamma, bn_beta, bn_mean, bn_var,
                                  w2, b2)
    jax.block_until_ready((tokens, flat))

    # sanity check against pure-JAX reference (slightly looser tolerance: the
    # softmax normalizer uses the EUP approx reciprocal)
    ref_tok, ref_flat = _reference(x, w1, b1, bn_gamma, bn_beta, bn_mean, bn_var,
                                   w2, b2)
    assert tokens.shape == (N, L, C)
    assert flat.shape == (N, H * W, C)
    assert jnp.allclose(tokens, ref_tok, atol=2e-3, rtol=2e-3)
    assert jnp.allclose(flat, ref_flat, atol=1e-6, rtol=1e-6)

    print("KERNEL_OK")
</pallas_src>

<mosaic_0001>
module attributes {stable_mosaic.version = 11 : i64} {
  func.func @_tokenizer_kernel(%arg0: i32, %arg1: memref<2x128x128xf32, #tpu.memory_space<vmem>>, %arg2: memref<128x8xf32, #tpu.memory_space<vmem>>, %arg3: memref<1x8xf32, #tpu.memory_space<vmem>>, %arg4: memref<8x8xf32, #tpu.memory_space<vmem>>, %arg5: memref<1x8xf32, #tpu.memory_space<vmem>>, %arg6: memref<2x8x128xf32, #tpu.memory_space<vmem>>, %arg7: memref<2x128x128xf32, #tpu.memory_space<vmem>>) attributes {dimension_semantics = [#tpu.dimension_semantics<parallel>], iteration_bounds = array<i64: 2>, scalar_prefetch = 0 : i64, scratch_operands = 0 : i64, tpu.core_type = #tpu.core_type<tc>, window_params = [{transform_indices = @transform_0, window_bounds = array<i64: 2, 128, 128>}, {pipeline_mode = #tpu.pipeline_mode<synchronous>, transform_indices = @transform_1, window_bounds = array<i64: 128, 8>}, {pipeline_mode = #tpu.pipeline_mode<synchronous>, transform_indices = @transform_2, window_bounds = array<i64: 1, 8>}, {pipeline_mode = #tpu.pipeline_mode<synchronous>, transform_indices = @transform_3, window_bounds = array<i64: 8, 8>}, {pipeline_mode = #tpu.pipeline_mode<synchronous>, transform_indices = @transform_4, window_bounds = array<i64: 1, 8>}, {transform_indices = @transform_5, window_bounds = array<i64: 2, 8, 128>}, {transform_indices = @transform_6, window_bounds = array<i64: 2, 128, 128>}]} {
    %c0 = arith.constant 0 : index
    %c0_0 = arith.constant 0 : index
    %c0_1 = arith.constant 0 : index
    %0 = vector.load %arg1[%c0, %c0_0, %c0_1] : memref<2x128x128xf32, #tpu.memory_space<vmem>>, vector<1x128x128xf32>
    %1 = vector.shape_cast %0 : vector<1x128x128xf32> to vector<128x128xf32>
    %2 = tpu.transpose %1, [1, 0] : vector<128x128xf32> -> vector<128x128xf32>
    %c0_2 = arith.constant 0 : index
    %c0_3 = arith.constant 0 : index
    %c0_4 = arith.constant 0 : index
    %3 = vector.load %arg7[%c0_2, %c0_3, %c0_4] : memref<2x128x128xf32, #tpu.memory_space<vmem>>, vector<1x128x128xf32>
    %4 = vector.shape_cast %3 : vector<1x128x128xf32> to vector<128x128xf32>
    %5 = vector.shape_cast %2 : vector<128x128xf32> to vector<1x128x128xf32>
    tpu.vector_store %arg7[%c0_2, %c0_3, %c0_4], %5 {strides = array<i32>} : memref<2x128x128xf32, #tpu.memory_space<vmem>>, vector<1x128x128xf32>,
    %c0_5 = arith.constant 0 : index
    %c0_6 = arith.constant 0 : index
    %6 = vector.load %arg2[%c0_5, %c0_6] : memref<128x8xf32, #tpu.memory_space<vmem>>, vector<128x8xf32>
    %cst = arith.constant dense<0.000000e+00> : vector<128x8xf32>
    %7 = tpu.matmul %2, %6, %cst {dimension_numbers = #tpu.dot_dimension_numbers<[1], [0], [0], [1], [0, 0, 1, 1], [], []>} : vector<128x128xf32>, vector<128x8xf32>, vector<128x8xf32> -> vector<128x8xf32>
    %c0_7 = arith.constant 0 : index
    %c0_8 = arith.constant 0 : index
    %8 = vector.load %arg3[%c0_7, %c0_8] : memref<1x8xf32, #tpu.memory_space<vmem>>, vector<1x8xf32>
    %9 = vector.broadcast %8 : vector<1x8xf32> to vector<128x8xf32>
    %10 = arith.addf %7, %9 : vector<128x8xf32>
    %11 = arith.negf %10 : vector<128x8xf32>
    %12 = math.exp %11 : vector<128x8xf32>
    %cst_9 = arith.constant 1.000000e+00 : f32
    %13 = vector.broadcast %cst_9 : f32 to vector<128x8xf32>
    %14 = arith.addf %13, %12 : vector<128x8xf32>
    %15 = arith.divf %13, %14 : vector<128x8xf32>
    %16 = arith.mulf %10, %15 : vector<128x8xf32>
    %c0_10 = arith.constant 0 : index
    %c0_11 = arith.constant 0 : index
    %17 = vector.load %arg4[%c0_10, %c0_11] : memref<8x8xf32, #tpu.memory_space<vmem>>, vector<8x8xf32>
    %cst_12 = arith.constant dense<0.000000e+00> : vector<128x8xf32>
    %18 = tpu.matmul %16, %17, %cst_12 {dimension_numbers = #tpu.dot_dimension_numbers<[1], [0], [0], [1], [0, 0, 1, 1], [], []>} : vector<128x8xf32>, vector<8x8xf32>, vector<128x8xf32> -> vector<128x8xf32>
    %c0_13 = arith.constant 0 : index
    %c0_14 = arith.constant 0 : index
    %19 = vector.load %arg5[%c0_13, %c0_14] : memref<1x8xf32, #tpu.memory_space<vmem>>, vector<1x8xf32>
    %20 = vector.broadcast %19 : vector<1x8xf32> to vector<128x8xf32>
    %21 = arith.addf %18, %20 : vector<128x8xf32>
    %cst_15 = arith.constant dense<0xFF800000> : vector<8xf32>
    %22 = vector.multi_reduction <maximumf>, %21, %cst_15 [0] : vector<128x8xf32> to vector<8xf32>
    %23 = vector.shape_cast %22 : vector<8xf32> to vector<1x8xf32>
    %24 = vector.broadcast %23 : vector<1x8xf32> to vector<128x8xf32>
    %25 = arith.subf %21, %24 : vector<128x8xf32>
    %26 = math.exp %25 : vector<128x8xf32>
    %cst_16 = arith.constant dense<0.000000e+00> : vector<8xf32>
    %27 = vector.multi_reduction <add>, %26, %cst_16 [0] : vector<128x8xf32> to vector<8xf32>
    %28 = vector.shape_cast %27 : vector<8xf32> to vector<1x8xf32>
    %29 = tpu.reciprocal %28 {approx = true} : vector<1x8xf32> -> vector<1x8xf32>
    %30 = vector.broadcast %29 : vector<1x8xf32> to vector<128x8xf32>
    %31 = arith.mulf %26, %30 : vector<128x8xf32>
    %cst_17 = arith.constant dense<0.000000e+00> : vector<8x128xf32>
    %32 = tpu.matmul %31, %2, %cst_17 {dimension_numbers = #tpu.dot_dimension_numbers<[0], [0], [1], [1], [0, 1, 1, 1], [], []>} : vector<128x8xf32>, vector<128x128xf32>, vector<8x128xf32> -> vector<8x128xf32>
    %c0_18 = arith.constant 0 : index
    %c0_19 = arith.constant 0 : index
    %c0_20 = arith.constant 0 : index
    %33 = vector.load %arg6[%c0_18, %c0_19, %c0_20] : memref<2x8x128xf32, #tpu.memory_space<vmem>>, vector<1x8x128xf32>
    %34 = vector.shape_cast %33 : vector<1x8x128xf32> to vector<8x128xf32>
    %35 = vector.shape_cast %32 : vector<8x128xf32> to vector<1x8x128xf32>
    tpu.vector_store %arg6[%c0_18, %c0_19, %c0_20], %35 {strides = array<i32>} : memref<2x8x128xf32, #tpu.memory_space<vmem>>, vector<1x8x128xf32>,
    %c1 = arith.constant 1 : index
    %c0_21 = arith.constant 0 : index
    %c0_22 = arith.constant 0 : index
    %36 = vector.load %arg1[%c1, %c0_21, %c0_22] : memref<2x128x128xf32, #tpu.memory_space<vmem>>, vector<1x128x128xf32>
    %37 = vector.shape_cast %36 : vector<1x128x128xf32> to vector<128x128xf32>
    %38 = tpu.transpose %37, [1, 0] : vector<128x128xf32> -> vector<128x128xf32>
    %c1_23 = arith.constant 1 : index
    %c0_24 = arith.constant 0 : index
    %c0_25 = arith.constant 0 : index
    %39 = vector.load %arg7[%c1_23, %c0_24, %c0_25] : memref<2x128x128xf32, #tpu.memory_space<vmem>>, vector<1x128x128xf32>
    %40 = vector.shape_cast %39 : vector<1x128x128xf32> to vector<128x128xf32>
    %41 = vector.shape_cast %38 : vector<128x128xf32> to vector<1x128x128xf32>
    tpu.vector_store %arg7[%c1_23, %c0_24, %c0_25], %41 {strides = array<i32>} : memref<2x128x128xf32, #tpu.memory_space<vmem>>, vector<1x128x128xf32>,
    %c0_26 = arith.constant 0 : index
    %c0_27 = arith.constant 0 : index
    %42 = vector.load %arg2[%c0_26, %c0_27] : memref<128x8xf32, #tpu.memory_space<vmem>>, vector<128x8xf32>
    %cst_28 = arith.constant dense<0.000000e+00> : vector<128x8xf32>
    %43 = tpu.matmul %38, %42, %cst_28 {dimension_numbers = #tpu.dot_dimension_numbers<[1], [0], [0], [1], [0, 0, 1, 1], [], []>} : vector<128x128xf32>, vector<128x8xf32>, vector<128x8xf32> -> vector<128x8xf32>
    %c0_29 = arith.constant 0 : index
    %c0_30 = arith.constant 0 : index
    %44 = vector.load %arg3[%c0_29, %c0_30] : memref<1x8xf32, #tpu.memory_space<vmem>>, vector<1x8xf32>
    %45 = vector.broadcast %44 : vector<1x8xf32> to vector<128x8xf32>
    %46 = arith.addf %43, %45 : vector<128x8xf32>
    %47 = arith.negf %46 : vector<128x8xf32>
    %48 = math.exp %47 : vector<128x8xf32>
    %cst_31 = arith.constant 1.000000e+00 : f32
    %49 = vector.broadcast %cst_31 : f32 to vector<128x8xf32>
    %50 = arith.addf %49, %48 : vector<128x8xf32>
    %51 = arith.divf %49, %50 : vector<128x8xf32>
    %52 = arith.mulf %46, %51 : vector<128x8xf32>
    %c0_32 = arith.constant 0 : index
    %c0_33 = arith.constant 0 : index
    %53 = vector.load %arg4[%c0_32, %c0_33] : memref<8x8xf32, #tpu.memory_space<vmem>>, vector<8x8xf32>
    %cst_34 = arith.constant dense<0.000000e+00> : vector<128x8xf32>
    %54 = tpu.matmul %52, %53, %cst_34 {dimension_numbers = #tpu.dot_dimension_numbers<[1], [0], [0], [1], [0, 0, 1, 1], [], []>} : vector<128x8xf32>, vector<8x8xf32>, vector<128x8xf32> -> vector<128x8xf32>
    %c0_35 = arith.constant 0 : index
    %c0_36 = arith.constant 0 : index
    %55 = vector.load %arg5[%c0_35, %c0_36] : memref<1x8xf32, #tpu.memory_space<vmem>>, vector<1x8xf32>
    %56 = vector.broadcast %55 : vector<1x8xf32> to vector<128x8xf32>
    %57 = arith.addf %54, %56 : vector<128x8xf32>
    %cst_37 = arith.constant dense<0xFF800000> : vector<8xf32>
    %58 = vector.multi_reduction <maximumf>, %57, %cst_37 [0] : vector<128x8xf32> to vector<8xf32>
    %59 = vector.shape_cast %58 : vector<8xf32> to vector<1x8xf32>
    %60 = vector.broadcast %59 : vector<1x8xf32> to vector<128x8xf32>
    %61 = arith.subf %57, %60 : vector<128x8xf32>
    %62 = math.exp %61 : vector<128x8xf32>
    %cst_38 = arith.constant dense<0.000000e+00> : vector<8xf32>
    %63 = vector.multi_reduction <add>, %62, %cst_38 [0] : vector<128x8xf32> to vector<8xf32>
    %64 = vector.shape_cast %63 : vector<8xf32> to vector<1x8xf32>
    %65 = tpu.reciprocal %64 {approx = true} : vector<1x8xf32> -> vector<1x8xf32>
    %66 = vector.broadcast %65 : vector<1x8xf32> to vector<128x8xf32>
    %67 = arith.mulf %62, %66 : vector<128x8xf32>
    %cst_39 = arith.constant dense<0.000000e+00> : vector<8x128xf32>
    %68 = tpu.matmul %67, %38, %cst_39 {dimension_numbers = #tpu.dot_dimension_numbers<[0], [0], [1], [1], [0, 1, 1, 1], [], []>} : vector<128x8xf32>, vector<128x128xf32>, vector<8x128xf32> -> vector<8x128xf32>
    %c1_40 = arith.constant 1 : index
    %c0_41 = arith.constant 0 : index
    %c0_42 = arith.constant 0 : index
    %69 = vector.load %arg6[%c1_40, %c0_41, %c0_42] : memref<2x8x128xf32, #tpu.memory_space<vmem>>, vector<1x8x128xf32>
    %70 = vector.shape_cast %69 : vector<1x8x128xf32> to vector<8x128xf32>
    %71 = vector.shape_cast %68 : vector<8x128xf32> to vector<1x8x128xf32>
    tpu.vector_store %arg6[%c1_40, %c0_41, %c0_42], %71 {strides = array<i32>} : memref<2x8x128xf32, #tpu.memory_space<vmem>>, vector<1x8x128xf32>,
    return
  }
  func.func @transform_0(%arg0: i32) -> (i32, i32, i32) {
    %c0_i32 = arith.constant 0 : i32
    %c0_i32_0 = arith.constant 0 : i32
    %c0_i32_1 = arith.constant 0 : i32
    return %arg0, %c0_i32, %c0_i32_0 : i32, i32, i32
  }
  func.func @transform_1(%arg0: i32) -> (i32, i32) {
    %c0_i32 = arith.constant 0 : i32
    %c0_i32_0 = arith.constant 0 : i32
    %c0_i32_1 = arith.constant 0 : i32
    return %c0_i32, %c0_i32_0 : i32, i32
  }
  func.func @transform_2(%arg0: i32) -> (i32, i32) {
    %c0_i32 = arith.constant 0 : i32
    %c0_i32_0 = arith.constant 0 : i32
    %c0_i32_1 = arith.constant 0 : i32
    return %c0_i32, %c0_i32_0 : i32, i32
  }
  func.func @transform_3(%arg0: i32) -> (i32, i32) {
    %c0_i32 = arith.constant 0 : i32
    %c0_i32_0 = arith.constant 0 : i32
    %c0_i32_1 = arith.constant 0 : i32
    return %c0_i32, %c0_i32_0 : i32, i32
  }
  func.func @transform_4(%arg0: i32) -> (i32, i32) {
    %c0_i32 = arith.constant 0 : i32
    %c0_i32_0 = arith.constant 0 : i32
    %c0_i32_1 = arith.constant 0 : i32
    return %c0_i32, %c0_i32_0 : i32, i32
  }
  func.func @transform_5(%arg0: i32) -> (i32, i32, i32) {
    %c0_i32 = arith.constant 0 : i32
    %c0_i32_0 = arith.constant 0 : i32
    %c0_i32_1 = arith.constant 0 : i32
    return %arg0, %c0_i32, %c0_i32_0 : i32, i32, i32
  }
  func.func @transform_6(%arg0: i32) -> (i32, i32, i32) {
    %c0_i32 = arith.constant 0 : i32
    %c0_i32_0 = arith.constant 0 : i32
    %c0_i32_1 = arith.constant 0 : i32
    return %arg0, %c0_i32, %c0_i32_0 : i32, i32, i32
  }
}

</mosaic_0001>

<llo_original>
// kernel: tpu_custom_call.1
$region0: #{tpu_custom_call.1}
  #allocation0 [shape = 'u32[]', space=smem, size = 0x4, offset = 0x4, fixed_abs, tag = 'smem constant byte address 0x4 - core index']
  #allocation1 [shape = 'u32[144,128]{1,0:T(1,128)}', space=vmem, size = 0x12000, scoped, tag = 'internal scratch']
  %s0 = inlined_call_operand.hbm [shape: f32[4,128,128], index: 0, kind: input, shape index: {}]
  %s1 = inlined_call_operand.vmem [shape: f32[128,8], index: 1, kind: input, shape index: {}]
  %s2 = inlined_call_operand.vmem [shape: f32[1,8], index: 2, kind: input, shape index: {}]
  %s3 = inlined_call_operand.vmem [shape: f32[8,8], index: 3, kind: input, shape index: {}]
  %s4 = inlined_call_operand.vmem [shape: f32[1,8], index: 4, kind: input, shape index: {}]
  %s5 = inlined_call_operand.hbm [shape: f32[4,8,128], index: 5, kind: output, shape index: {0}]
  %s6 = inlined_call_operand.hbm [shape: f32[4,128,128], index: 6, kind: output, shape index: {1}]
  %7 = xla_tuple %s5, %s6
  %s8 = sld [smem:[#allocation0]]
  $region65: #{tpu_custom_call.1} parent=0
    _
  %s10 = ssub.s32 1, %s8
  %s11 = scalar_select 0, %s10, %s8
  $region1: #{tpu_custom_call.1} parent=0
    #allocation2 [shape = 'u8[262144]{0}', space=vmem, size = 0x40000, scoped, tag = 'input window, operand 0']
    #allocation3 [shape = 's32[2]{0}', space=sflag, size = 0x8, scoped, tag = 'scoped memory for tpu_custom_call.1']
    #allocation4 [shape = 's32[2]{0}', space=sflag, size = 0x8, scoped, tag = 'scoped memory for tpu_custom_call.1']
    #allocation5 [shape = 'u8[16384]{0}', space=vmem, size = 0x4000, scoped, tag = 'output window, operand 0']
    #allocation6 [shape = 'u8[262144]{0}', space=vmem, size = 0x40000, scoped, tag = 'output window, operand 1']
    #allocation7 [shape = 's32[2]{0}', space=sflag, size = 0x8, scoped, tag = 'scoped memory for tpu_custom_call.1']
    %12 = vsyncpa [#allocation3], 0
    %s13 = scalar_lea.sflag [#allocation3], 1
    %14 = vsyncpa %s13, 0
    %15 = vsyncpa [#allocation4], 0
    %s16 = scalar_lea.sflag [#allocation4], 1
    %17 = vsyncpa %s16, 0
    %18 = vsyncpa [#allocation7], 0
    %s19 = scalar_lea.sflag [#allocation7], 1
    %20 = vsyncpa %s19, 0
    loop: start=0, step=1, limit=4
    $region2: #{tpu_custom_call.1} parent=1 // loop_pre_header
      _
    $region3: #{tpu_custom_call.1} parent=1 // loop_header
      %s22 = sphi 0, %s26
      %p23 = scmp.ge.s32.totalorder %s22, 4
      %s32 = sphi 0, %s34
      %s35 = sphi 0, %s32
      %s36 = sphi 0, %s35
      %s52 = sphi 0, %s36
      %s56 = sphi 0, %s56
      %s58 = sphi 0, %s56
      %s59 = sphi 0, %s58
      %s73 = sphi 0, %s59
      %s77 = sphi 0, %s77
      %s79 = sphi 0, %s77
      %s80 = sphi 0, %s79
      %s94 = sphi 0, %s80
      %s98 = sphi 0, %s98
      %s100 = sphi 0, %s98
      %s101 = sphi 0, %s100
      %s115 = sphi 0, %s101
      %s119 = sphi 0, %s119
      %s121 = sphi 0, %s119
      %s122 = sphi 0, %s121
      %s136 = sphi 0, %s122
      %s142 = sphi 0, %s144
      %s145 = sphi 0, %s142
      %s146 = sphi 0, %s145
      %s162 = sphi 0, %s146
      %s168 = sphi 0, %s170
      %s171 = sphi 0, %s168
      %s172 = sphi 0, %s171
      %s188 = sphi 0, %s172
    $region4: #{tpu_custom_call.1} parent=1 // loop_header_branch
      %25 = sbr.rel (%p23) target = $region8
    $region5: #{tpu_custom_call.1} parent=1 // loop_body
      %s27 = ssub.s32 %s22, 1
      %s28 = ssub.s32 %s22, 2
      %s29 = sadd.s32 %s22, 1
      %s30 = ssub.s32 %s22, %s29
      %p31 = scmp.eq.s32.totalorder %s30, 0
      %s33 = sadd.s32 %s32, 1
      %s34 = scalar_select %p31, %s32, %s33
      %p37 = pneg %p31
      %p38 = scmp.eq.s32.totalorder %s22, 1
      %p39 = por %p37, %p38
      %p40 = scmp.ne.s32.totalorder %s32, %s35
      %p41 = scmp.eq.s32.totalorder %s22, 0
      %p42 = por %p40, %p41
      %p43 = scmp.ne.s32.totalorder %s32, %s35
      %p44 = scmp.eq.s32.totalorder %s27, 1
      %p45 = por %p43, %p44
      %p46 = scmp.ne.s32.totalorder %s35, %s36
      %p47 = scmp.eq.s32.totalorder %s27, 0
      %p48 = por %p46, %p47
      %p49 = scmp.ne.s32.totalorder %s35, %s36
      %p50 = scmp.eq.s32.totalorder %s28, 1
      %p51 = por %p49, %p50
      %p53 = scmp.ne.s32.totalorder %s36, %s52
      %p54 = scmp.eq.s32.totalorder %s28, 0
      %p55 = por %p53, %p54
      %s57 = sadd.s32 %s56, 1
      %p60 = scmp.eq.s32.totalorder %s22, 1
      %p61 = scmp.ne.s32.totalorder %s56, %s58
      %p62 = scmp.eq.s32.totalorder %s22, 0
      %p63 = por %p61, %p62
      %p64 = scmp.ne.s32.totalorder %s56, %s58
      %p65 = scmp.eq.s32.totalorder %s27, 1
      %p66 = por %p64, %p65
      %p67 = scmp.ne.s32.totalorder %s58, %s59
      %p68 = scmp.eq.s32.totalorder %s27, 0
      %p69 = por %p67, %p68
      %p70 = scmp.ne.s32.totalorder %s58, %s59
      %p71 = scmp.eq.s32.totalorder %s28, 1
      %p72 = por %p70, %p71
      %p74 = scmp.ne.s32.totalorder %s59, %s73
      %p75 = scmp.eq.s32.totalorder %s28, 0
      %p76 = por %p74, %p75
      %s78 = sadd.s32 %s77, 1
      %p81 = scmp.eq.s32.totalorder %s22, 1
      %p82 = scmp.ne.s32.totalorder %s77, %s79
      %p83 = scmp.eq.s32.totalorder %s22, 0
      %p84 = por %p82, %p83
      %p85 = scmp.ne.s32.totalorder %s77, %s79
      %p86 = scmp.eq.s32.totalorder %s27, 1
      %p87 = por %p85, %p86
      %p88 = scmp.ne.s32.totalorder %s79, %s80
      %p89 = scmp.eq.s32.totalorder %s27, 0
      %p90 = por %p88, %p89
      %p91 = scmp.ne.s32.totalorder %s79, %s80
      %p92 = scmp.eq.s32.totalorder %s28, 1
      %p93 = por %p91, %p92
      %p95 = scmp.ne.s32.totalorder %s80, %s94
      %p96 = scmp.eq.s32.totalorder %s28, 0
      %p97 = por %p95, %p96
      %s99 = sadd.s32 %s98, 1
      %p102 = scmp.eq.s32.totalorder %s22, 1
      %p103 = scmp.ne.s32.totalorder %s98, %s100
      %p104 = scmp.eq.s32.totalorder %s22, 0
      %p105 = por %p103, %p104
      %p106 = scmp.ne.s32.totalorder %s98, %s100
      %p107 = scmp.eq.s32.totalorder %s27, 1
      %p108 = por %p106, %p107
      %p109 = scmp.ne.s32.totalorder %s100, %s101
      %p110 = scmp.eq.s32.totalorder %s27, 0
      %p111 = por %p109, %p110
      %p112 = scmp.ne.s32.totalorder %s100, %s101
      %p113 = scmp.eq.s32.totalorder %s28, 1
      %p114 = por %p112, %p113
      %p116 = scmp.ne.s32.totalorder %s101, %s115
      %p117 = scmp.eq.s32.totalorder %s28, 0
      %p118 = por %p116, %p117
      %s120 = sadd.s32 %s119, 1
      %p123 = scmp.eq.s32.totalorder %s22, 1
      %p124 = scmp.ne.s32.totalorder %s119, %s121
      %p125 = scmp.eq.s32.totalorder %s22, 0
      %p126 = por %p124, %p125
      %p127 = scmp.ne.s32.totalorder %s119, %s121
      %p128 = scmp.eq.s32.totalorder %s27, 1
      %p129 = por %p127, %p128
      %p130 = scmp.ne.s32.totalorder %s121, %s122
      %p131 = scmp.eq.s32.totalorder %s27, 0
      %p132 = por %p130, %p131
      %p133 = scmp.ne.s32.totalorder %s121, %s122
      %p134 = scmp.eq.s32.totalorder %s28, 1
      %p135 = por %p133, %p134
      %p137 = scmp.ne.s32.totalorder %s122, %s136
      %p138 = scmp.eq.s32.totalorder %s28, 0
      %p139 = por %p137, %p138
      %s140 = ssub.s32 %s22, %s29
      %p141 = scmp.eq.s32.totalorder %s140, 0
      %s143 = sadd.s32 %s142, 1
      %s144 = scalar_select %p141, %s142, %s143
      %p147 = pneg %p141
      %p148 = scmp.eq.s32.totalorder %s22, 1
      %p149 = por %p147, %p148
      %p150 = scmp.ne.s32.totalorder %s142, %s145
      %p151 = scmp.eq.s32.totalorder %s22, 0
      %p152 = por %p150, %p151
      %p153 = scmp.ne.s32.totalorder %s142, %s145
      %p154 = scmp.eq.s32.totalorder %s27, 1
      %p155 = por %p153, %p154
      %p156 = scmp.ne.s32.totalorder %s145, %s146
      %p157 = scmp.eq.s32.totalorder %s27, 0
      %p158 = por %p156, %p157
      %p159 = scmp.ne.s32.totalorder %s145, %s146
      %p160 = scmp.eq.s32.totalorder %s28, 1
      %p161 = por %p159, %p160
      %p163 = scmp.ne.s32.totalorder %s146, %s162
      %p164 = scmp.eq.s32.totalorder %s28, 0
      %p165 = por %p163, %p164
      %s166 = ssub.s32 %s22, %s29
      %p167 = scmp.eq.s32.totalorder %s166, 0
      %s169 = sadd.s32 %s168, 1
      %s170 = scalar_select %p167, %s168, %s169
      %p173 = pneg %p167
      %p174 = scmp.eq.s32.totalorder %s22, 1
      %p175 = por %p173, %p174
      %p176 = scmp.ne.s32.totalorder %s168, %s171
      %p177 = scmp.eq.s32.totalorder %s22, 0
      %p178 = por %p176, %p177
      %p179 = scmp.ne.s32.totalorder %s168, %s171
      %p180 = scmp.eq.s32.totalorder %s27, 1
      %p181 = por %p179, %p180
      %p182 = scmp.ne.s32.totalorder %s171, %s172
      %p183 = scmp.eq.s32.totalorder %s27, 0
      %p184 = por %p182, %p183
      %p185 = scmp.ne.s32.totalorder %s171, %s172
      %p186 = scmp.eq.s32.totalorder %s28, 1
      %p187 = por %p185, %p186
      %p189 = scmp.ne.s32.totalorder %s172, %s188
      %p190 = scmp.eq.s32.totalorder %s28, 0
      %p191 = por %p189, %p190
      %p192 = scmp.le.s32.totalorder 1, %s22
      %p193 = scmp.lt.s32.totalorder %s22, 3
      %p194 = pnand %p192, %p193
      %p195 = pneg %p194
      // Predicated region
      $region9: #{tpu_custom_call.1} parent=5 // pred_check
        _
      $region10: #{tpu_custom_call.1} parent=5 // pred_check_branch
        %197 = sbr.rel (%p194) target = $region12
      $region11: #{tpu_custom_call.1} parent=5 // pred_region
        %s198 = ssub.s32 %s22, 1
        // Predicated region
        $region13: #{tpu_custom_call.1} parent=11 // pred_check
          %p199 = pneg %p69
        $region14: #{tpu_custom_call.1} parent=11 // pred_check_branch
          %201 = sbr.rel (%p199) target = $region16
        $region15: #{tpu_custom_call.1} parent=11 // pred_region
          _
        $region16: #{tpu_custom_call.1} parent=11 // pred_fallthru
          _
        // Predicated region
        $region17: #{tpu_custom_call.1} parent=11 // pred_check
          %p202 = pneg %p90
        $region18: #{tpu_custom_call.1} parent=11 // pred_check_branch
          %204 = sbr.rel (%p202) target = $region20
        $region19: #{tpu_custom_call.1} parent=11 // pred_region
          _
        $region20: #{tpu_custom_call.1} parent=11 // pred_fallthru
          _
        // Predicated region
        $region21: #{tpu_custom_call.1} parent=11 // pred_check
          %p205 = pneg %p111
        $region22: #{tpu_custom_call.1} parent=11 // pred_check_branch
          %207 = sbr.rel (%p205) target = $region24
        $region23: #{tpu_custom_call.1} parent=11 // pred_region
          _
        $region24: #{tpu_custom_call.1} parent=11 // pred_fallthru
          _
        // Predicated region
        $region25: #{tpu_custom_call.1} parent=11 // pred_check
          %p208 = pneg %p132
        $region26: #{tpu_custom_call.1} parent=11 // pred_check_branch
          %210 = sbr.rel (%p208) target = $region28
        $region27: #{tpu_custom_call.1} parent=11 // pred_region
          _
        $region28: #{tpu_custom_call.1} parent=11 // pred_fallthru
          _
      $region12: #{tpu_custom_call.1} parent=5 // pred_fallthru
        _
      %p211 = scmp.lt.s32.totalorder %s22, 2
      // Predicated region
      $region29: #{tpu_custom_call.1} parent=5 // pred_check
        %p212 = pneg %p211
      $region30: #{tpu_custom_call.1} parent=5 // pred_check_branch
        %214 = sbr.rel (%p212) target = $region32
      $region31: #{tpu_custom_call.1} parent=5 // pred_region
        // Predicated region
        $region33: #{tpu_custom_call.1} parent=31 // pred_check
          %p215 = pneg %p42
        $region34: #{tpu_custom_call.1} parent=31 // pred_check_branch
          %217 = sbr.rel (%p215) target = $region36
        $region35: #{tpu_custom_call.1} parent=31 // pred_region
          %s218 = sand.u32 %s32, 1
          %s219 = scalar_lea.sflag [#allocation3], %s218
          %s220 = sand.u32 %s32, 1
          %s221 = smul.addr %s220, 256
          %s222 = scalar_lea.vmem [#allocation2], %s221
          %s223 = smul.u32 2, %s22
          %s225 = ssub.s32 4096, 4096
          %226 = vsyncadd %s219, %s225
          %s227 = smul.addr %s223, 16
          %s228 = smul.addr %s227, 128
          %s229 = scalar_lea.hbm %s0, %s228
          %s230 = sshll.u32 %s222, 4
          %s231 = int_to_ptr.vmem [resolvable:$true] %s230
          %236 = dma.hbm_to_vmem [thread:$0]  %s229, 4096, %s231, %s219, 128, 128, 8
        $region36: #{tpu_custom_call.1} parent=31 // pred_fallthru
          _
      $region32: #{tpu_custom_call.1} parent=5 // pred_fallthru
        _
      %p237 = scmp.le.s32.totalorder 1, %s22
      %p238 = scmp.lt.s32.totalorder %s22, 3
      %p239 = pnand %p237, %p238
      %p240 = pneg %p239
      // Predicated region
      $region37: #{tpu_custom_call.1} parent=5 // pred_check
        _
      $region38: #{tpu_custom_call.1} parent=5 // pred_check_branch
        %242 = sbr.rel (%p239) target = $region40
      $region39: #{tpu_custom_call.1} parent=5 // pred_region
        %s243 = ssub.s32 %s22, 1
        %s244 = sand.u32 %s35, 1
        %s245 = scalar_lea.sflag [#allocation3], %s244
        %s246 = sand.u32 %s35, 1
        %s247 = smul.addr %s246, 256
        %s248 = scalar_lea.vmem [#allocation2], %s247
        // Predicated region
        $region41: #{tpu_custom_call.1} parent=39 // pred_check
          %p249 = pneg %p48
        $region42: #{tpu_custom_call.1} parent=39 // pred_check_branch
          %251 = sbr.rel (%p249) target = $region44
        $region43: #{tpu_custom_call.1} parent=39 // pred_region
          %252 = dma.done %s245, 4096
        $region44: #{tpu_custom_call.1} parent=39 // pred_fallthru
          _
        %s253 = sand.u32 %s35, 1
        %s254 = scalar_lea.sflag [#allocation3], %s253
        %s255 = sand.u32 %s35, 1
        %s256 = smul.addr %s255, 256
        %s257 = scalar_lea.vmem [#allocation2], %s256
        %p258 = pneg %p48
        %p259 = pneg %p45
        %p260 = pneg %p69
        %p261 = pneg %p66
        %p262 = pneg %p90
        %p263 = pneg %p87
        %p264 = pneg %p111
        %p265 = pneg %p108
        %p266 = pneg %p132
        %p267 = pneg %p129
        %p268 = pneg %p158
        %p269 = pneg %p155
        %s270 = sand.u32 %s145, 1
        %s271 = scalar_lea.sflag [#allocation4], %s270
        %s272 = sand.u32 %s145, 1
        %s273 = smul.addr %s272, 16
        %s274 = scalar_lea.vmem [#allocation5], %s273
        %p275 = pneg %p184
        %p276 = pneg %p181
        %s277 = sand.u32 %s171, 1
        %s278 = scalar_lea.sflag [#allocation7], %s277
        %s279 = sand.u32 %s171, 1
        %s280 = smul.addr %s279, 256
        %s281 = scalar_lea.vmem [#allocation6], %s280
        %s282 = smul.u32 2, %s27
        %s283 = smul.u32 2, %s27
        %s284 = smul.u32 2, %s27
        %v285 = vld [vmem:[%s248] sm:$0xff]
        %v286 = vld [vmem:[%s248 + $0x8] sm:$0xff]
        %v287 = vld [vmem:[%s248 + $0x10] sm:$0xff]
        %v288 = vld [vmem:[%s248 + $0x18] sm:$0xff]
        %v289 = vld [vmem:[%s248 + $0x20] sm:$0xff]
        %v290 = vld [vmem:[%s248 + $0x28] sm:$0xff]
        %v291 = vld [vmem:[%s248 + $0x30] sm:$0xff]
        %v292 = vld [vmem:[%s248 + $0x38] sm:$0xff]
        %v293 = vld [vmem:[%s248 + $0x40] sm:$0xff]
        %v294 = vld [vmem:[%s248 + $0x48] sm:$0xff]
        %v295 = vld [vmem:[%s248 + $0x50] sm:$0xff]
        %v296 = vld [vmem:[%s248 + $0x58] sm:$0xff]
        %v297 = vld [vmem:[%s248 + $0x60] sm:$0xff]
        %v298 = vld [vmem:[%s248 + $0x68] sm:$0xff]
        %v299 = vld [vmem:[%s248 + $0x70] sm:$0xff]
        %v300 = vld [vmem:[%s248 + $0x78] sm:$0xff]
        %301 = vxpose.xlu0.b32.start [1/16] %v285, 128
        %302 = vxpose.xlu0.b32.cont [2/16] %v286, 128
        %303 = vxpose.xlu0.b32.cont [3/16] %v287, 128
        %304 = vxpose.xlu0.b32.cont [4/16] %v288, 128
        %305 = vxpose.xlu0.b32.cont [5/16] %v289, 128
        %306 = vxpose.xlu0.b32.cont [6/16] %v290, 128
        %307 = vxpose.xlu0.b32.cont [7/16] %v291, 128
        %308 = vxpose.xlu0.b32.cont [8/16] %v292, 128
        %309 = vxpose.xlu0.b32.cont [9/16] %v293, 128
        %310 = vxpose.xlu0.b32.cont [10/16] %v294, 128
        %311 = vxpose.xlu0.b32.cont [11/16] %v295, 128
        %312 = vxpose.xlu0.b32.cont [12/16] %v296, 128
        %313 = vxpose.xlu0.b32.cont [13/16] %v297, 128
        %314 = vxpose.xlu0.b32.cont [14/16] %v298, 128
        %315 = vxpose.xlu0.b32.cont [15/16] %v299, 128
        %316 = vxpose.xlu0.b32.end [16/16] %v300, 128
        %v317 = vpop.trf.xlu0
        %v318 = vpop.trf.xlu0
        %v319 = vpop.trf.xlu0
        %v320 = vpop.trf.xlu0
        %v321 = vpop.trf.xlu0
        %v322 = vpop.trf.xlu0
        %v323 = vpop.trf.xlu0
        %v324 = vpop.trf.xlu0
        %v325 = vpop.trf.xlu0
        %v326 = vpop.trf.xlu0
        %v327 = vpop.trf.xlu0
        %v328 = vpop.trf.xlu0
        %v329 = vpop.trf.xlu0
        %v330 = vpop.trf.xlu0
        %v331 = vpop.trf.xlu0
        %v332 = vpop.trf.xlu0
        %333 = vst [vmem:[%s281] sm:$0xff] %v317
        %334 = vst [vmem:[%s281 + $0x8] sm:$0xff] %v318
        %335 = vst [vmem:[%s281 + $0x10] sm:$0xff] %v319
        %336 = vst [vmem:[%s281 + $0x18] sm:$0xff] %v320
        %337 = vst [vmem:[%s281 + $0x20] sm:$0xff] %v321
        %338 = vst [vmem:[%s281 + $0x28] sm:$0xff] %v322
        %339 = vst [vmem:[%s281 + $0x30] sm:$0xff] %v323
        %340 = vst [vmem:[%s281 + $0x38] sm:$0xff] %v324
        %341 = vst [vmem:[%s281 + $0x40] sm:$0xff] %v325
        %342 = vst [vmem:[%s281 + $0x48] sm:$0xff] %v326
        %343 = vst [vmem:[%s281 + $0x50] sm:$0xff] %v327
        %344 = vst [vmem:[%s281 + $0x58] sm:$0xff] %v328
        %345 = vst [vmem:[%s281 + $0x60] sm:$0xff] %v329
        %346 = vst [vmem:[%s281 + $0x68] sm:$0xff] %v330
        %347 = vst [vmem:[%s281 + $0x70] sm:$0xff] %v331
        %348 = vst [vmem:[%s281 + $0x78] sm:$0xff] %v332
        %v349 = vld [vmem:[%s1] sm:$0xff]
        %v350 = vld [vmem:[%s1 + $0x8] sm:$0xff]
        %v351 = vld [vmem:[%s1 + $0x10] sm:$0xff]
        %v352 = vld [vmem:[%s1 + $0x18] sm:$0xff]
        %v353 = vld [vmem:[%s1 + $0x20] sm:$0xff]
        %v354 = vld [vmem:[%s1 + $0x28] sm:$0xff]
        %v355 = vld [vmem:[%s1 + $0x30] sm:$0xff]
        %v356 = vld [vmem:[%s1 + $0x38] sm:$0xff]
        %v357 = vld [vmem:[%s1 + $0x40] sm:$0xff]
        %v358 = vld [vmem:[%s1 + $0x48] sm:$0xff]
        %v359 = vld [vmem:[%s1 + $0x50] sm:$0xff]
        %v360 = vld [vmem:[%s1 + $0x58] sm:$0xff]
        %v361 = vld [vmem:[%s1 + $0x60] sm:$0xff]
        %v362 = vld [vmem:[%s1 + $0x68] sm:$0xff]
        %v363 = vld [vmem:[%s1 + $0x70] sm:$0xff]
        %v364 = vld [vmem:[%s1 + $0x78] sm:$0xff]
        %v365 = vld [vmem:[%s2] sm:$0x1]
        %v367 = vlaneseq
        %v368 = vshrl.u32 %v367, 7
        %v369 = vsub.s32 0, %v368
        %v370 = vrot.slane %v365, %v369
        %372 = vmatprep.subr.mxu0 0.0
        %373 = vmatpush1.msra.mxu0 %v364
        %374 = vmatprep.subr.mxu0 0.0
        %375 = vmatpush1.msra.mxu0 %v363
        %376 = vmatprep.subr.mxu0 0.0
        %377 = vmatpush1.msra.mxu0 %v362
        %378 = vmatprep.subr.mxu0 0.0
        %379 = vmatpush1.msra.mxu0 %v361
        %380 = vmatprep.subr.mxu0 0.0
        %381 = vmatpush1.msra.mxu0 %v360
        %382 = vmatprep.subr.mxu0 0.0
        %383 = vmatpush1.msra.mxu0 %v359
        %384 = vmatprep.subr.mxu0 0.0
        %385 = vmatpush1.msra.mxu0 %v358
        %386 = vmatprep.subr.mxu0 0.0
        %387 = vmatpush1.msra.mxu0 %v357
        %388 = vmatprep.subr.mxu0 0.0
        %389 = vmatpush1.msra.mxu0 %v356
        %390 = vmatprep.subr.mxu0 0.0
        %391 = vmatpush1.msra.mxu0 %v355
        %392 = vmatprep.subr.mxu0 0.0
        %393 = vmatpush1.msra.mxu0 %v354
        %394 = vmatprep.subr.mxu0 0.0
        %395 = vmatpush1.msra.mxu0 %v353
        %396 = vmatprep.subr.mxu0 0.0
        %397 = vmatpush1.msra.mxu0 %v352
        %398 = vmatprep.subr.mxu0 0.0
        %399 = vmatpush1.msra.mxu0 %v351
        %400 = vmatprep.subr.mxu0 0.0
        %401 = vmatpush1.msra.mxu0 %v350
        %402 = vmatprep.subr.mxu0 0.0
        %403 = vmatpush1.msra.mxu0 %v349
        %404 = vmatprep.subr.mxu0 0.0
        %405 = vmatpush2.msra.mxu0 0.0
        %406 = vmatprep.subr.mxu0 0.0
        %407 = vmatpush2.msra.mxu0 0.0
        %408 = vmatprep.subr.mxu0 0.0
        %409 = vmatpush2.msra.mxu0 0.0
        %410 = vmatprep.subr.mxu0 0.0
        %411 = vmatpush2.msra.mxu0 0.0
        %412 = vmatprep.subr.mxu0 0.0
        %413 = vmatpush2.msra.mxu0 0.0
        %414 = vmatprep.subr.mxu0 0.0
        %415 = vmatpush2.msra.mxu0 0.0
        %416 = vmatprep.subr.mxu0 0.0
        %417 = vmatpush2.msra.mxu0 0.0
        %418 = vmatprep.subr.mxu0 0.0
        %419 = vmatpush2.msra.mxu0 0.0
        %420 = vmatprep.subr.mxu0 0.0
        %421 = vmatpush2.msra.mxu0 0.0
        %422 = vmatprep.subr.mxu0 0.0
        %423 = vmatpush2.msra.mxu0 0.0
        %424 = vmatprep.subr.mxu0 0.0
        %425 = vmatpush2.msra.mxu0 0.0
        %426 = vmatprep.subr.mxu0 0.0
        %427 = vmatpush2.msra.mxu0 0.0
        %428 = vmatprep.subr.mxu0 0.0
        %429 = vmatpush2.msra.mxu0 0.0
        %430 = vmatprep.subr.mxu0 0.0
        %431 = vmatpush2.msra.mxu0 0.0
        %432 = vmatprep.subr.mxu0 0.0
        %433 = vmatpush2.msra.mxu0 0.0
        %434 = vmatprep.subr.mxu0 0.0
        %435 = vmatpush2.msra.mxu0 0.0
        %436 = vmatprep.mubr.f32.mxu0 0.0
        %437 = vmatmul.mubr.f32.gmra.mxu0 %v317
        %v438 = vpop.f32.mrf.mxu0
        %v439 = vadd.f32 %v370, %v438
        %v440 = vpop.f32.mrf.mxu0
        %441 = vmatprep.mubr.f32.mxu0 0.0
        %442 = vmatmul.mubr.f32.gmra.mxu0 %v318
        %v443 = vpop.f32.mrf.mxu0
        %v444 = vadd.f32 %v370, %v443
        %v445 = vpop.f32.mrf.mxu0
        %446 = vmatprep.mubr.f32.mxu0 0.0
        %447 = vmatmul.mubr.f32.gmra.mxu0 %v319
        %v448 = vpop.f32.mrf.mxu0
        %v449 = vadd.f32 %v370, %v448
        %v450 = vpop.f32.mrf.mxu0
        %451 = vmatprep.mubr.f32.mxu0 0.0
        %452 = vmatmul.mubr.f32.gmra.mxu0 %v320
        %v453 = vpop.f32.mrf.mxu0
        %v454 = vadd.f32 %v370, %v453
        %v455 = vpop.f32.mrf.mxu0
        %456 = vmatprep.mubr.f32.mxu0 0.0
        %457 = vmatmul.mubr.f32.gmra.mxu0 %v321
        %v458 = vpop.f32.mrf.mxu0
        %v459 = vadd.f32 %v370, %v458
        %v460 = vpop.f32.mrf.mxu0
        %461 = vmatprep.mubr.f32.mxu0 0.0
        %462 = vmatmul.mubr.f32.gmra.mxu0 %v322
        %v463 = vpop.f32.mrf.mxu0
        %v464 = vadd.f32 %v370, %v463
        %v465 = vpop.f32.mrf.mxu0
        %466 = vmatprep.mubr.f32.mxu0 0.0
        %467 = vmatmul.mubr.f32.gmra.mxu0 %v323
        %v468 = vpop.f32.mrf.mxu0
        %v469 = vadd.f32 %v370, %v468
        %v470 = vpop.f32.mrf.mxu0
        %471 = vmatprep.mubr.f32.mxu0 0.0
        %472 = vmatmul.mubr.f32.gmra.mxu0 %v324
        %v473 = vpop.f32.mrf.mxu0
        %v474 = vadd.f32 %v370, %v473
        %v475 = vpop.f32.mrf.mxu0
        %476 = vmatprep.mubr.f32.mxu0 0.0
        %477 = vmatmul.mubr.f32.gmra.mxu0 %v325
        %v478 = vpop.f32.mrf.mxu0
        %v479 = vadd.f32 %v370, %v478
        %v480 = vpop.f32.mrf.mxu0
        %481 = vmatprep.mubr.f32.mxu0 0.0
        %482 = vmatmul.mubr.f32.gmra.mxu0 %v326
        %v483 = vpop.f32.mrf.mxu0
        %v484 = vadd.f32 %v370, %v483
        %v485 = vpop.f32.mrf.mxu0
        %486 = vmatprep.mubr.f32.mxu0 0.0
        %487 = vmatmul.mubr.f32.gmra.mxu0 %v327
        %v488 = vpop.f32.mrf.mxu0
        %v489 = vadd.f32 %v370, %v488
        %v490 = vpop.f32.mrf.mxu0
        %491 = vmatprep.mubr.f32.mxu0 0.0
        %492 = vmatmul.mubr.f32.gmra.mxu0 %v328
        %v493 = vpop.f32.mrf.mxu0
        %v494 = vadd.f32 %v370, %v493
        %v495 = vpop.f32.mrf.mxu0
        %496 = vmatprep.mubr.f32.mxu0 0.0
        %497 = vmatmul.mubr.f32.gmra.mxu0 %v329
        %v498 = vpop.f32.mrf.mxu0
        %v499 = vadd.f32 %v370, %v498
        %v500 = vpop.f32.mrf.mxu0
        %501 = vmatprep.mubr.f32.mxu0 0.0
        %502 = vmatmul.mubr.f32.gmra.mxu0 %v330
        %v503 = vpop.f32.mrf.mxu0
        %v504 = vadd.f32 %v370, %v503
        %v505 = vpop.f32.mrf.mxu0
        %506 = vmatprep.mubr.f32.mxu0 0.0
        %507 = vmatmul.mubr.f32.gmra.mxu0 %v331
        %v508 = vpop.f32.mrf.mxu0
        %v509 = vadd.f32 %v370, %v508
        %v510 = vpop.f32.mrf.mxu0
        %511 = vmatprep.mubr.f32.mxu0 0.0
        %512 = vmatmul.mubr.f32.gmra.mxu0 %v332
        %v513 = vpop.f32.mrf.mxu0
        %v514 = vadd.f32 %v370, %v513
        %v515 = vpop.f32.mrf.mxu0
        %516 = vdwg.mxu0
        %v517 = vxor.u32 %v439, 2147483648
        %v518 = vxor.u32 %v444, 2147483648
        %v519 = vxor.u32 %v449, 2147483648
        %v520 = vxor.u32 %v454, 2147483648
        %v521 = vxor.u32 %v459, 2147483648
        %v522 = vxor.u32 %v464, 2147483648
        %v523 = vxor.u32 %v469, 2147483648
        %v524 = vxor.u32 %v474, 2147483648
        %v525 = vxor.u32 %v479, 2147483648
        %v526 = vxor.u32 %v484, 2147483648
        %v527 = vxor.u32 %v489, 2147483648
        %v528 = vxor.u32 %v494, 2147483648
        %v529 = vxor.u32 %v499, 2147483648
        %v530 = vxor.u32 %v504, 2147483648
        %v531 = vxor.u32 %v509, 2147483648
        %v532 = vxor.u32 %v514, 2147483648
        %v533 = vmul.f32 %v517, 1.442695
        %v534 = vpow.pop %v533
        %v535 = vmul.f32 %v518, 1.442695
        %v536 = vpow.pop %v535
        %v537 = vmul.f32 %v519, 1.442695
        %v538 = vpow.pop %v537
        %v539 = vmul.f32 %v520, 1.442695
        %v540 = vpow.pop %v539
        %v541 = vmul.f32 %v521, 1.442695
        %v542 = vpow.pop %v541
        %v543 = vmul.f32 %v522, 1.442695
        %v544 = vpow.pop %v543
        %v545 = vmul.f32 %v523, 1.442695
        %v546 = vpow.pop %v545
        %v547 = vmul.f32 %v524, 1.442695
        %v548 = vpow.pop %v547
        %v549 = vmul.f32 %v525, 1.442695
        %v550 = vpow.pop %v549
        %v551 = vmul.f32 %v526, 1.442695
        %v552 = vpow.pop %v551
        %v553 = vmul.f32 %v527, 1.442695
        %v554 = vpow.pop %v553
        %v555 = vmul.f32 %v528, 1.442695
        %v556 = vpow.pop %v555
        %v557 = vmul.f32 %v529, 1.442695
        %v558 = vpow.pop %v557
        %v559 = vmul.f32 %v530, 1.442695
        %v560 = vpow.pop %v559
        %v561 = vmul.f32 %v531, 1.442695
        %v562 = vpow.pop %v561
        %v563 = vmul.f32 %v532, 1.442695
        %v564 = vpow.pop %v563
        %v565 = vadd.f32 %v534, 1.0
        %v566 = vadd.f32 %v536, 1.0
        %v567 = vadd.f32 %v538, 1.0
        %v568 = vadd.f32 %v540, 1.0
        %v569 = vadd.f32 %v542, 1.0
        %v570 = vadd.f32 %v544, 1.0
        %v571 = vadd.f32 %v546, 1.0
        %v572 = vadd.f32 %v548, 1.0
        %v573 = vadd.f32 %v550, 1.0
        %v574 = vadd.f32 %v552, 1.0
        %v575 = vadd.f32 %v554, 1.0
        %v576 = vadd.f32 %v556, 1.0
        %v577 = vadd.f32 %v558, 1.0
        %v578 = vadd.f32 %v560, 1.0
        %v579 = vadd.f32 %v562, 1.0
        %v580 = vadd.f32 %v564, 1.0
        %v581 = vrcp.pop %v565
        %v582 = vmul.f32 1.0, %v581
        %v583 = vrcp.pop %v566
        %v584 = vmul.f32 1.0, %v583
        %v585 = vrcp.pop %v567
        %v586 = vmul.f32 1.0, %v585
        %v587 = vrcp.pop %v568
        %v588 = vmul.f32 1.0, %v587
        %v589 = vrcp.pop %v569
        %v590 = vmul.f32 1.0, %v589
        %v591 = vrcp.pop %v570
        %v592 = vmul.f32 1.0, %v591
        %v593 = vrcp.pop %v571
        %v594 = vmul.f32 1.0, %v593
        %v595 = vrcp.pop %v572
        %v596 = vmul.f32 1.0, %v595
        %v597 = vrcp.pop %v573
        %v598 = vmul.f32 1.0, %v597
        %v599 = vrcp.pop %v574
        %v600 = vmul.f32 1.0, %v599
        %v601 = vrcp.pop %v575
        %v602 = vmul.f32 1.0, %v601
        %v603 = vrcp.pop %v576
        %v604 = vmul.f32 1.0, %v603
        %v605 = vrcp.pop %v577
        %v606 = vmul.f32 1.0, %v605
        %v607 = vrcp.pop %v578
        %v608 = vmul.f32 1.0, %v607
        %v609 = vrcp.pop %v579
        %v610 = vmul.f32 1.0, %v609
        %v611 = vrcp.pop %v580
        %v612 = vmul.f32 1.0, %v611
        %v613 = vmul.f32 %v439, %v582
        %v614 = vmul.f32 %v444, %v584
        %v615 = vmul.f32 %v449, %v586
        %v616 = vmul.f32 %v454, %v588
        %v617 = vmul.f32 %v459, %v590
        %v618 = vmul.f32 %v464, %v592
        %v619 = vmul.f32 %v469, %v594
        %v620 = vmul.f32 %v474, %v596
        %v621 = vmul.f32 %v479, %v598
        %v622 = vmul.f32 %v484, %v600
        %v623 = vmul.f32 %v489, %v602
        %v624 = vmul.f32 %v494, %v604
        %v625 = vmul.f32 %v499, %v606
        %v626 = vmul.f32 %v504, %v608
        %v627 = vmul.f32 %v509, %v610
        %v628 = vmul.f32 %v514, %v612
        %v629 = vld [vmem:[%s3] sm:$0xff]
        %v630 = vld [vmem:[%s4] sm:$0x1]
        %v632 = vlaneseq
        %v633 = vshrl.u32 %v632, 7
        %v634 = vsub.s32 0, %v633
        %v635 = vrot.slane %v630, %v634
        %vm637 = vcmask 64512
        %v639 = vsel %vm637, %v613, 0
        %v642 = vsel %vm637, %v614, 0
        %v645 = vsel %vm637, %v615, 0
        %v648 = vsel %vm637, %v616, 0
        %v651 = vsel %vm637, %v617, 0
        %v654 = vsel %vm637, %v618, 0
        %v657 = vsel %vm637, %v619, 0
        %v660 = vsel %vm637, %v620, 0
        %v663 = vsel %vm637, %v621, 0
        %v666 = vsel %vm637, %v622, 0
        %v669 = vsel %vm637, %v623, 0
        %v672 = vsel %vm637, %v624, 0
        %v675 = vsel %vm637, %v625, 0
        %v678 = vsel %vm637, %v626, 0
        %v681 = vsel %vm637, %v627, 0
        %v684 = vsel %vm637, %v628, 0
        %686 = vmatprep.subr.mxu0 0.0
        %687 = vmatpush1.msra.mxu0 0.0
        %688 = vmatprep.subr.mxu0 0.0
        %689 = vmatpush1.msra.mxu0 0.0
        %690 = vmatprep.subr.mxu0 0.0
        %691 = vmatpush1.msra.mxu0 0.0
        %692 = vmatprep.subr.mxu0 0.0
        %693 = vmatpush1.msra.mxu0 0.0
        %694 = vmatprep.subr.mxu0 0.0
        %695 = vmatpush1.msra.mxu0 0.0
        %696 = vmatprep.subr.mxu0 0.0
        %697 = vmatpush1.msra.mxu0 0.0
        %698 = vmatprep.subr.mxu0 0.0
        %699 = vmatpush1.msra.mxu0 0.0
        %700 = vmatprep.subr.mxu0 0.0
        %701 = vmatpush1.msra.mxu0 0.0
        %702 = vmatprep.subr.mxu0 0.0
        %703 = vmatpush1.msra.mxu0 0.0
        %704 = vmatprep.subr.mxu0 0.0
        %705 = vmatpush1.msra.mxu0 0.0
        %706 = vmatprep.subr.mxu0 0.0
        %707 = vmatpush1.msra.mxu0 0.0
        %708 = vmatprep.subr.mxu0 0.0
        %709 = vmatpush1.msra.mxu0 0.0
        %710 = vmatprep.subr.mxu0 0.0
        %711 = vmatpush1.msra.mxu0 0.0
        %712 = vmatprep.subr.mxu0 0.0
        %713 = vmatpush1.msra.mxu0 0.0
        %714 = vmatprep.subr.mxu0 0.0
        %715 = vmatpush1.msra.mxu0 0.0
        %716 = vmatprep.subr.mxu0 0.0
        %717 = vmatpush1.msra.mxu0 %v629
        %718 = vmatprep.subr.mxu0 0.0
        %719 = vmatpush2.msra.mxu0 0.0
        %720 = vmatprep.subr.mxu0 0.0
        %721 = vmatpush2.msra.mxu0 0.0
        %722 = vmatprep.subr.mxu0 0.0
        %723 = vmatpush2.msra.mxu0 0.0
        %724 = vmatprep.subr.mxu0 0.0
        %725 = vmatpush2.msra.mxu0 0.0
        %726 = vmatprep.subr.mxu0 0.0
        %727 = vmatpush2.msra.mxu0 0.0
        %728 = vmatprep.subr.mxu0 0.0
        %729 = vmatpush2.msra.mxu0 0.0
        %730 = vmatprep.subr.mxu0 0.0
        %731 = vmatpush2.msra.mxu0 0.0
        %732 = vmatprep.subr.mxu0 0.0
        %733 = vmatpush2.msra.mxu0 0.0
        %734 = vmatprep.subr.mxu0 0.0
        %735 = vmatpush2.msra.mxu0 0.0
        %736 = vmatprep.subr.mxu0 0.0
        %737 = vmatpush2.msra.mxu0 0.0
        %738 = vmatprep.subr.mxu0 0.0
        %739 = vmatpush2.msra.mxu0 0.0
        %740 = vmatprep.subr.mxu0 0.0
        %741 = vmatpush2.msra.mxu0 0.0
        %742 = vmatprep.subr.mxu0 0.0
        %743 = vmatpush2.msra.mxu0 0.0
        %744 = vmatprep.subr.mxu0 0.0
        %745 = vmatpush2.msra.mxu0 0.0
        %746 = vmatprep.subr.mxu0 0.0
        %747 = vmatpush2.msra.mxu0 0.0
        %748 = vmatprep.subr.mxu0 0.0
        %749 = vmatpush2.msra.mxu0 0.0
        %750 = vmatprep.mubr.f32.mxu0 0.0
        %751 = vmatmul.mubr.f32.gmra.mxu0 %v639
        %v752 = vpop.f32.mrf.mxu0
        %v753 = vadd.f32 %v635, %v752
        %v754 = vpop.f32.mrf.mxu0
        %755 = vmatprep.mubr.f32.mxu0 0.0
        %756 = vmatmul.mubr.f32.gmra.mxu0 %v642
        %v757 = vpop.f32.mrf.mxu0
        %v758 = vadd.f32 %v635, %v757
        %v759 = vpop.f32.mrf.mxu0
        %760 = vmatprep.mubr.f32.mxu0 0.0
        %761 = vmatmul.mubr.f32.gmra.mxu0 %v645
        %v762 = vpop.f32.mrf.mxu0
        %v763 = vadd.f32 %v635, %v762
        %v764 = vpop.f32.mrf.mxu0
        %765 = vmatprep.mubr.f32.mxu0 0.0
        %766 = vmatmul.mubr.f32.gmra.mxu0 %v648
        %v767 = vpop.f32.mrf.mxu0
        %v768 = vadd.f32 %v635, %v767
        %v769 = vpop.f32.mrf.mxu0
        %770 = vmatprep.mubr.f32.mxu0 0.0
        %771 = vmatmul.mubr.f32.gmra.mxu0 %v651
        %v772 = vpop.f32.mrf.mxu0
        %v773 = vadd.f32 %v635, %v772
        %v774 = vpop.f32.mrf.mxu0
        %775 = vmatprep.mubr.f32.mxu0 0.0
        %776 = vmatmul.mubr.f32.gmra.mxu0 %v654
        %v777 = vpop.f32.mrf.mxu0
        %v778 = vadd.f32 %v635, %v777
        %v779 = vpop.f32.mrf.mxu0
        %780 = vmatprep.mubr.f32.mxu0 0.0
        %781 = vmatmul.mubr.f32.gmra.mxu0 %v657
        %v782 = vpop.f32.mrf.mxu0
        %v783 = vadd.f32 %v635, %v782
        %v784 = vpop.f32.mrf.mxu0
        %785 = vmatprep.mubr.f32.mxu0 0.0
        %786 = vmatmul.mubr.f32.gmra.mxu0 %v660
        %v787 = vpop.f32.mrf.mxu0
        %v788 = vadd.f32 %v635, %v787
        %v789 = vpop.f32.mrf.mxu0
        %790 = vmatprep.mubr.f32.mxu0 0.0
        %791 = vmatmul.mubr.f32.gmra.mxu0 %v663
        %v792 = vpop.f32.mrf.mxu0
        %v793 = vadd.f32 %v635, %v792
        %v794 = vpop.f32.mrf.mxu0
        %795 = vmatprep.mubr.f32.mxu0 0.0
        %796 = vmatmul.mubr.f32.gmra.mxu0 %v666
        %v797 = vpop.f32.mrf.mxu0
        %v798 = vadd.f32 %v635, %v797
        %v799 = vpop.f32.mrf.mxu0
        %800 = vmatprep.mubr.f32.mxu0 0.0
        %801 = vmatmul.mubr.f32.gmra.mxu0 %v669
        %v802 = vpop.f32.mrf.mxu0
        %v803 = vadd.f32 %v635, %v802
        %v804 = vpop.f32.mrf.mxu0
        %805 = vmatprep.mubr.f32.mxu0 0.0
        %806 = vmatmul.mubr.f32.gmra.mxu0 %v672
        %v807 = vpop.f32.mrf.mxu0
        %v808 = vadd.f32 %v635, %v807
        %v809 = vpop.f32.mrf.mxu0
        %810 = vmatprep.mubr.f32.mxu0 0.0
        %811 = vmatmul.mubr.f32.gmra.mxu0 %v675
        %v812 = vpop.f32.mrf.mxu0
        %v813 = vadd.f32 %v635, %v812
        %v814 = vpop.f32.mrf.mxu0
        %815 = vmatprep.mubr.f32.mxu0 0.0
        %816 = vmatmul.mubr.f32.gmra.mxu0 %v678
        %v817 = vpop.f32.mrf.mxu0
        %v818 = vadd.f32 %v635, %v817
        %v819 = vpop.f32.mrf.mxu0
        %820 = vmatprep.mubr.f32.mxu0 0.0
        %821 = vmatmul.mubr.f32.gmra.mxu0 %v681
        %v822 = vpop.f32.mrf.mxu0
        %v823 = vadd.f32 %v635, %v822
        %v824 = vpop.f32.mrf.mxu0
        %825 = vmatprep.mubr.f32.mxu0 0.0
        %826 = vmatmul.mubr.f32.gmra.mxu0 %v684
        %v827 = vpop.f32.mrf.mxu0
        %v828 = vadd.f32 %v635, %v827
        %v829 = vpop.f32.mrf.mxu0
        %830 = vdwg.mxu0
        %v831 = vsel %vm637, %v753, -inf
        %v832 = vsel %vm637, %v758, -inf
        %v833 = vsel %vm637, %v763, -inf
        %v834 = vsel %vm637, %v768, -inf
        %v835 = vsel %vm637, %v773, -inf
        %v836 = vmax.f32 %v831, %v835
        %v837 = vsel %vm637, %v778, -inf
        %v838 = vmax.f32 %v832, %v837
        %v839 = vsel %vm637, %v783, -inf
        %v840 = vmax.f32 %v833, %v839
        %v841 = vsel %vm637, %v788, -inf
        %v842 = vmax.f32 %v834, %v841
        %v843 = vsel %vm637, %v793, -inf
        %v844 = vmax.f32 %v836, %v843
        %v845 = vsel %vm637, %v798, -inf
        %v846 = vmax.f32 %v838, %v845
        %v847 = vsel %vm637, %v803, -inf
        %v848 = vmax.f32 %v840, %v847
        %v849 = vsel %vm637, %v808, -inf
        %v850 = vmax.f32 %v842, %v849
        %v851 = vsel %vm637, %v813, -inf
        %v852 = vmax.f32 %v844, %v851
        %v853 = vsel %vm637, %v818, -inf
        %v854 = vmax.f32 %v846, %v853
        %v855 = vsel %vm637, %v823, -inf
        %v856 = vmax.f32 %v848, %v855
        %v857 = vsel %vm637, %v828, -inf
        %v858 = vmax.f32 %v850, %v857
        %v859 = vmax.f32 %v852, %v854
        %v860 = vmax.f32 %v856, %v858
        %v861 = vmax.f32 %v859, %v860
        %v862 = vrot.slane %v861, 4
        %v863 = vmax.f32 %v861, %v862
        %v864 = vrot.slane %v863, 2
        %v865 = vmax.f32 %v863, %v864
        %v866 = vrot.slane %v865, 1
        %v867 = vmax.f32 %v865, %v866
        %v868 = vsub.f32 %v753, %v867
        %v869 = vsub.f32 %v758, %v867
        %v870 = vsub.f32 %v763, %v867
        %v871 = vsub.f32 %v768, %v867
        %v872 = vsub.f32 %v773, %v867
        %v873 = vsub.f32 %v778, %v867
        %v874 = vsub.f32 %v783, %v867
        %v875 = vsub.f32 %v788, %v867
        %v876 = vsub.f32 %v793, %v867
        %v877 = vsub.f32 %v798, %v867
        %v878 = vsub.f32 %v803, %v867
        %v879 = vsub.f32 %v808, %v867
        %v880 = vsub.f32 %v813, %v867
        %v881 = vsub.f32 %v818, %v867
        %v882 = vsub.f32 %v823, %v867
        %v883 = vsub.f32 %v828, %v867
        %v884 = vmul.f32 %v868, 1.442695
        %v885 = vpow.pop %v884
        %v886 = vmul.f32 %v869, 1.442695
        %v887 = vpow.pop %v886
        %v888 = vmul.f32 %v870, 1.442695
        %v889 = vpow.pop %v888
        %v890 = vmul.f32 %v871, 1.442695
        %v891 = vpow.pop %v890
        %v892 = vmul.f32 %v872, 1.442695
        %v893 = vpow.pop %v892
        %v894 = vmul.f32 %v873, 1.442695
        %v895 = vpow.pop %v894
        %v896 = vmul.f32 %v874, 1.442695
        %v897 = vpow.pop %v896
        %v898 = vmul.f32 %v875, 1.442695
        %v899 = vpow.pop %v898
        %v900 = vmul.f32 %v876, 1.442695
        %v901 = vpow.pop %v900
        %v902 = vmul.f32 %v877, 1.442695
        %v903 = vpow.pop %v902
        %v904 = vmul.f32 %v878, 1.442695
        %v905 = vpow.pop %v904
        %v906 = vmul.f32 %v879, 1.442695
        %v907 = vpow.pop %v906
        %v908 = vmul.f32 %v880, 1.442695
        %v909 = vpow.pop %v908
        %v910 = vmul.f32 %v881, 1.442695
        %v911 = vpow.pop %v910
        %v912 = vmul.f32 %v882, 1.442695
        %v913 = vpow.pop %v912
        %v914 = vmul.f32 %v883, 1.442695
        %v915 = vpow.pop %v914
        %v916 = vsel %vm637, %v885, 0.0
        %v917 = vsel %vm637, %v887, 0.0
        %v918 = vadd.f32 %v916, %v917
        %v919 = vsel %vm637, %v889, 0.0
        %v920 = vadd.f32 %v918, %v919
        %v921 = vsel %vm637, %v891, 0.0
        %v922 = vadd.f32 %v920, %v921
        %v923 = vsel %vm637, %v893, 0.0
        %v924 = vadd.f32 %v922, %v923
        %v925 = vsel %vm637, %v895, 0.0
        %v926 = vadd.f32 %v924, %v925
        %v927 = vsel %vm637, %v897, 0.0
        %v928 = vadd.f32 %v926, %v927
        %v929 = vsel %vm637, %v899, 0.0
        %v930 = vadd.f32 %v928, %v929
        %v931 = vsel %vm637, %v901, 0.0
        %v932 = vadd.f32 %v930, %v931
        %v933 = vsel %vm637, %v903, 0.0
        %v934 = vadd.f32 %v932, %v933
        %v935 = vsel %vm637, %v905, 0.0
        %v936 = vadd.f32 %v934, %v935
        %v937 = vsel %vm637, %v907, 0.0
        %v938 = vadd.f32 %v936, %v937
        %v939 = vsel %vm637, %v909, 0.0
        %v940 = vadd.f32 %v938, %v939
        %v941 = vsel %vm637, %v911, 0.0
        %v942 = vadd.f32 %v940, %v941
        %v943 = vsel %vm637, %v913, 0.0
        %v944 = vadd.f32 %v942, %v943
        %v945 = vsel %vm637, %v915, 0.0
        %v946 = vadd.f32 %v944, %v945
        %v947 = vrot.slane %v946, 4
        %v948 = vadd.f32 %v946, %v947
        %v949 = vrot.slane %v948, 2
        %v950 = vadd.f32 %v948, %v949
        %v951 = vrot.slane %v950, 1
        %v952 = vadd.f32 %v950, %v951
        %v953 = vrcp.pop %v952
        %v954 = vmul.f32 %v885, %v953
        %v955 = vmul.f32 %v887, %v953
        %v956 = vmul.f32 %v889, %v953
        %v957 = vmul.f32 %v891, %v953
        %v958 = vmul.f32 %v893, %v953
        %v959 = vmul.f32 %v895, %v953
        %v960 = vmul.f32 %v897, %v953
        %v961 = vmul.f32 %v899, %v953
        %v962 = vmul.f32 %v901, %v953
        %v963 = vmul.f32 %v903, %v953
        %v964 = vmul.f32 %v905, %v953
        %v965 = vmul.f32 %v907, %v953
        %v966 = vmul.f32 %v909, %v953
        %v967 = vmul.f32 %v911, %v953
        %v968 = vmul.f32 %v913, %v953
        %v969 = vmul.f32 %v915, %v953
        %970 = vxpose.xlu0.b32.start [1/16] %v954, 128
        %971 = vxpose.xlu0.b32.cont [2/16] %v955, 128
        %972 = vxpose.xlu0.b32.cont [3/16] %v956, 128
        %973 = vxpose.xlu0.b32.cont [4/16] %v957, 128
        %974 = vxpose.xlu0.b32.cont [5/16] %v958, 128
        %975 = vxpose.xlu0.b32.cont [6/16] %v959, 128
        %976 = vxpose.xlu0.b32.cont [7/16] %v960, 128
        %977 = vxpose.xlu0.b32.cont [8/16] %v961, 128
        %978 = vxpose.xlu0.b32.cont [9/16] %v962, 128
        %979 = vxpose.xlu0.b32.cont [10/16] %v963, 128
        %980 = vxpose.xlu0.b32.cont [11/16] %v964, 128
        %981 = vxpose.xlu0.b32.cont [12/16] %v965, 128
        %982 = vxpose.xlu0.b32.cont [13/16] %v966, 128
        %983 = vxpose.xlu0.b32.cont [14/16] %v967, 128
        %984 = vxpose.xlu0.b32.cont [15/16] %v968, 128
        %985 = vxpose.xlu0.b32.end [16/16] %v969, 128
        %v986 = vpop.trf.xlu0
        %v987 = vpop.trf.xlu0
        %v988 = vpop.trf.xlu0
        %v989 = vpop.trf.xlu0
        %v990 = vpop.trf.xlu0
        %v991 = vpop.trf.xlu0
        %v992 = vpop.trf.xlu0
        %v993 = vpop.trf.xlu0
        %v994 = vpop.trf.xlu0
        %v995 = vpop.trf.xlu0
        %v996 = vpop.trf.xlu0
        %v997 = vpop.trf.xlu0
        %v998 = vpop.trf.xlu0
        %v999 = vpop.trf.xlu0
        %v1000 = vpop.trf.xlu0
        %v1001 = vpop.trf.xlu0
        %1002 = vmatprep.subr.mxu0 0.0
        %1003 = vmatpush1.msra.mxu0 %v332
        %1004 = vmatprep.subr.mxu0 0.0
        %1005 = vmatpush1.msra.mxu0 %v331
        %1006 = vmatprep.subr.mxu0 0.0
        %1007 = vmatpush1.msra.mxu0 %v330
        %1008 = vmatprep.subr.mxu0 0.0
        %1009 = vmatpush1.msra.mxu0 %v329
        %1010 = vmatprep.subr.mxu0 0.0
        %1011 = vmatpush1.msra.mxu0 %v328
        %1012 = vmatprep.subr.mxu0 0.0
        %1013 = vmatpush1.msra.mxu0 %v327
        %1014 = vmatprep.subr.mxu0 0.0
        %1015 = vmatpush1.msra.mxu0 %v326
        %1016 = vmatprep.subr.mxu0 0.0
        %1017 = vmatpush1.msra.mxu0 %v325
        %1018 = vmatprep.subr.mxu0 0.0
        %1019 = vmatpush1.msra.mxu0 %v324
        %1020 = vmatprep.subr.mxu0 0.0
        %1021 = vmatpush1.msra.mxu0 %v323
        %1022 = vmatprep.subr.mxu0 0.0
        %1023 = vmatpush1.msra.mxu0 %v322
        %1024 = vmatprep.subr.mxu0 0.0
        %1025 = vmatpush1.msra.mxu0 %v321
        %1026 = vmatprep.subr.mxu0 0.0
        %1027 = vmatpush1.msra.mxu0 %v320
        %1028 = vmatprep.subr.mxu0 0.0
        %1029 = vmatpush1.msra.mxu0 %v319
        %1030 = vmatprep.subr.mxu0 0.0
        %1031 = vmatpush1.msra.mxu0 %v318
        %1032 = vmatprep.subr.mxu0 0.0
        %1033 = vmatpush1.msra.mxu0 %v317
        %1034 = vmatprep.subr.mxu0 0.0
        %1035 = vmatpush2.msra.mxu0 0.0
        %1036 = vmatprep.subr.mxu0 0.0
        %1037 = vmatpush2.msra.mxu0 0.0
        %1038 = vmatprep.subr.mxu0 0.0
        %1039 = vmatpush2.msra.mxu0 0.0
        %1040 = vmatprep.subr.mxu0 0.0
        %1041 = vmatpush2.msra.mxu0 0.0
        %1042 = vmatprep.subr.mxu0 0.0
        %1043 = vmatpush2.msra.mxu0 0.0
        %1044 = vmatprep.subr.mxu0 0.0
        %1045 = vmatpush2.msra.mxu0 0.0
        %1046 = vmatprep.subr.mxu0 0.0
        %1047 = vmatpush2.msra.mxu0 0.0
        %1048 = vmatprep.subr.mxu0 0.0
        %1049 = vmatpush2.msra.mxu0 0.0
        %1050 = vmatprep.subr.mxu0 0.0
        %1051 = vmatpush2.msra.mxu0 0.0
        %1052 = vmatprep.subr.mxu0 0.0
        %1053 = vmatpush2.msra.mxu0 0.0
        %1054 = vmatprep.subr.mxu0 0.0
        %1055 = vmatpush2.msra.mxu0 0.0
        %1056 = vmatprep.subr.mxu0 0.0
        %1057 = vmatpush2.msra.mxu0 0.0
        %1058 = vmatprep.subr.mxu0 0.0
        %1059 = vmatpush2.msra.mxu0 0.0
        %1060 = vmatprep.subr.mxu0 0.0
        %1061 = vmatpush2.msra.mxu0 0.0
        %1062 = vmatprep.subr.mxu0 0.0
        %1063 = vmatpush2.msra.mxu0 0.0
        %1064 = vmatprep.subr.mxu0 0.0
        %1065 = vmatpush2.msra.mxu0 0.0
        %1066 = vmatprep.mubr.f32.mxu0 0.0
        %1067 = vmatmul.mubr.f32.gmra.mxu0 %v986
        %v1068 = vpop.f32.mrf.mxu0
        %v1069 = vadd.f32 0.0, %v1068
        %v1070 = vpop.f32.mrf.mxu0
        %1071 = vdwg.mxu0
        %1072 = vst [vmem:[%s274] sm:$0xff] %v1069
        %s1073 = scalar_lea.vmem %s248, 128 [#allocation2]
        %v1074 = vld [vmem:[%s1073] sm:$0xff]
        %v1075 = vld [vmem:[%s1073 + $0x8] sm:$0xff]
        %v1076 = vld [vmem:[%s1073 + $0x10] sm:$0xff]
        %v1077 = vld [vmem:[%s1073 + $0x18] sm:$0xff]
        %v1078 = vld [vmem:[%s1073 + $0x20] sm:$0xff]
        %v1079 = vld [vmem:[%s1073 + $0x28] sm:$0xff]
        %v1080 = vld [vmem:[%s1073 + $0x30] sm:$0xff]
        %v1081 = vld [vmem:[%s1073 + $0x38] sm:$0xff]
        %v1082 = vld [vmem:[%s1073 + $0x40] sm:$0xff]
        %v1083 = vld [vmem:[%s1073 + $0x48] sm:$0xff]
        %v1084 = vld [vmem:[%s1073 + $0x50] sm:$0xff]
        %v1085 = vld [vmem:[%s1073 + $0x58] sm:$0xff]
        %v1086 = vld [vmem:[%s1073 + $0x60] sm:$0xff]
        %v1087 = vld [vmem:[%s1073 + $0x68] sm:$0xff]
        %v1088 = vld [vmem:[%s1073 + $0x70] sm:$0xff]
        %v1089 = vld [vmem:[%s1073 + $0x78] sm:$0xff]
        %1090 = vxpose.xlu0.b32.start [1/16] %v1074, 128
        %1091 = vxpose.xlu0.b32.cont [2/16] %v1075, 128
        %1092 = vxpose.xlu0.b32.cont [3/16] %v1076, 128
        %1093 = vxpose.xlu0.b32.cont [4/16] %v1077, 128
        %1094 = vxpose.xlu0.b32.cont [5/16] %v1078, 128
        %1095 = vxpose.xlu0.b32.cont [6/16] %v1079, 128
        %1096 = vxpose.xlu0.b32.cont [7/16] %v1080, 128
        %1097 = vxpose.xlu0.b32.cont [8/16] %v1081, 128
        %1098 = vxpose.xlu0.b32.cont [9/16] %v1082, 128
        %1099 = vxpose.xlu0.b32.cont [10/16] %v1083, 128
        %1100 = vxpose.xlu0.b32.cont [11/16] %v1084, 128
        %1101 = vxpose.xlu0.b32.cont [12/16] %v1085, 128
        %1102 = vxpose.xlu0.b32.cont [13/16] %v1086, 128
        %1103 = vxpose.xlu0.b32.cont [14/16] %v1087, 128
        %1104 = vxpose.xlu0.b32.cont [15/16] %v1088, 128
        %1105 = vxpose.xlu0.b32.end [16/16] %v1089, 128
        %v1106 = vpop.trf.xlu0
        %v1107 = vpop.trf.xlu0
        %v1108 = vpop.trf.xlu0
        %v1109 = vpop.trf.xlu0
        %v1110 = vpop.trf.xlu0
        %v1111 = vpop.trf.xlu0
        %v1112 = vpop.trf.xlu0
        %v1113 = vpop.trf.xlu0
        %v1114 = vpop.trf.xlu0
        %v1115 = vpop.trf.xlu0
        %v1116 = vpop.trf.xlu0
        %v1117 = vpop.trf.xlu0
        %v1118 = vpop.trf.xlu0
        %v1119 = vpop.trf.xlu0
        %v1120 = vpop.trf.xlu0
        %v1121 = vpop.trf.xlu0
        %s1122 = scalar_lea.vmem %s281, 128 [#allocation6]
        %1123 = vst [vmem:[%s1122] sm:$0xff] %v1106
        %1124 = vst [vmem:[%s1122 + $0x8] sm:$0xff] %v1107
        %1125 = vst [vmem:[%s1122 + $0x10] sm:$0xff] %v1108
        %1126 = vst [vmem:[%s1122 + $0x18] sm:$0xff] %v1109
        %1127 = vst [vmem:[%s1122 + $0x20] sm:$0xff] %v1110
        %1128 = vst [vmem:[%s1122 + $0x28] sm:$0xff] %v1111
        %1129 = vst [vmem:[%s1122 + $0x30] sm:$0xff] %v1112
        %1130 = vst [vmem:[%s1122 + $0x38] sm:$0xff] %v1113
        %1131 = vst [vmem:[%s1122 + $0x40] sm:$0xff] %v1114
        %1132 = vst [vmem:[%s1122 + $0x48] sm:$0xff] %v1115
        %1133 = vst [vmem:[%s1122 + $0x50] sm:$0xff] %v1116
        %1134 = vst [vmem:[%s1122 + $0x58] sm:$0xff] %v1117
        %1135 = vst [vmem:[%s1122 + $0x60] sm:$0xff] %v1118
        %1136 = vst [vmem:[%s1122 + $0x68] sm:$0xff] %v1119
        %1137 = vst [vmem:[%s1122 + $0x70] sm:$0xff] %v1120
        %1138 = vst [vmem:[%s1122 + $0x78] sm:$0xff] %v1121
        %v1139 = vld [vmem:[%s1] sm:$0xff]
        %v1140 = vld [vmem:[%s1 + $0x8] sm:$0xff]
        %v1141 = vld [vmem:[%s1 + $0x10] sm:$0xff]
        %v1142 = vld [vmem:[%s1 + $0x18] sm:$0xff]
        %v1143 = vld [vmem:[%s1 + $0x20] sm:$0xff]
        %v1144 = vld [vmem:[%s1 + $0x28] sm:$0xff]
        %v1145 = vld [vmem:[%s1 + $0x30] sm:$0xff]
        %v1146 = vld [vmem:[%s1 + $0x38] sm:$0xff]
        %v1147 = vld [vmem:[%s1 + $0x40] sm:$0xff]
        %v1148 = vld [vmem:[%s1 + $0x48] sm:$0xff]
        %v1149 = vld [vmem:[%s1 + $0x50] sm:$0xff]
        %v1150 = vld [vmem:[%s1 + $0x58] sm:$0xff]
        %v1151 = vld [vmem:[%s1 + $0x60] sm:$0xff]
        %v1152 = vld [vmem:[%s1 + $0x68] sm:$0xff]
        %v1153 = vld [vmem:[%s1 + $0x70] sm:$0xff]
        %v1154 = vld [vmem:[%s1 + $0x78] sm:$0xff]
        %v1155 = vld [vmem:[%s2] sm:$0x1]
        %v1157 = vlaneseq
        %v1158 = vshrl.u32 %v1157, 7
        %v1159 = vsub.s32 0, %v1158
        %v1160 = vrot.slane %v1155, %v1159
        %1162 = vmatprep.subr.mxu0 0.0
        %1163 = vmatpush1.msra.mxu0 %v1154
        %1164 = vmatprep.subr.mxu0 0.0
        %1165 = vmatpush1.msra.mxu0 %v1153
        %1166 = vmatprep.subr.mxu0 0.0
        %1167 = vmatpush1.msra.mxu0 %v1152
        %1168 = vmatprep.subr.mxu0 0.0
        %1169 = vmatpush1.msra.mxu0 %v1151
        %1170 = vmatprep.subr.mxu0 0.0
        %1171 = vmatpush1.msra.mxu0 %v1150
        %1172 = vmatprep.subr.mxu0 0.0
        %1173 = vmatpush1.msra.mxu0 %v1149
        %1174 = vmatprep.subr.mxu0 0.0
        %1175 = vmatpush1.msra.mxu0 %v1148
        %1176 = vmatprep.subr.mxu0 0.0
        %1177 = vmatpush1.msra.mxu0 %v1147
        %1178 = vmatprep.subr.mxu0 0.0
        %1179 = vmatpush1.msra.mxu0 %v1146
        %1180 = vmatprep.subr.mxu0 0.0
        %1181 = vmatpush1.msra.mxu0 %v1145
        %1182 = vmatprep.subr.mxu0 0.0
        %1183 = vmatpush1.msra.mxu0 %v1144
        %1184 = vmatprep.subr.mxu0 0.0
        %1185 = vmatpush1.msra.mxu0 %v1143
        %1186 = vmatprep.subr.mxu0 0.0
        %1187 = vmatpush1.msra.mxu0 %v1142
        %1188 = vmatprep.subr.mxu0 0.0
        %1189 = vmatpush1.msra.mxu0 %v1141
        %1190 = vmatprep.subr.mxu0 0.0
        %1191 = vmatpush1.msra.mxu0 %v1140
        %1192 = vmatprep.subr.mxu0 0.0
        %1193 = vmatpush1.msra.mxu0 %v1139
        %1194 = vmatprep.subr.mxu0 0.0
        %1195 = vmatpush2.msra.mxu0 0.0
        %1196 = vmatprep.subr.mxu0 0.0
        %1197 = vmatpush2.msra.mxu0 0.0
        %1198 = vmatprep.subr.mxu0 0.0
        %1199 = vmatpush2.msra.mxu0 0.0
        %1200 = vmatprep.subr.mxu0 0.0
        %1201 = vmatpush2.msra.mxu0 0.0
        %1202 = vmatprep.subr.mxu0 0.0
        %1203 = vmatpush2.msra.mxu0 0.0
        %1204 = vmatprep.subr.mxu0 0.0
        %1205 = vmatpush2.msra.mxu0 0.0
        %1206 = vmatprep.subr.mxu0 0.0
        %1207 = vmatpush2.msra.mxu0 0.0
        %1208 = vmatprep.subr.mxu0 0.0
        %1209 = vmatpush2.msra.mxu0 0.0
        %1210 = vmatprep.subr.mxu0 0.0
        %1211 = vmatpush2.msra.mxu0 0.0
        %1212 = vmatprep.subr.mxu0 0.0
        %1213 = vmatpush2.msra.mxu0 0.0
        %1214 = vmatprep.subr.mxu0 0.0
        %1215 = vmatpush2.msra.mxu0 0.0
        %1216 = vmatprep.subr.mxu0 0.0
        %1217 = vmatpush2.msra.mxu0 0.0
        %1218 = vmatprep.subr.mxu0 0.0
        %1219 = vmatpush2.msra.mxu0 0.0
        %1220 = vmatprep.subr.mxu0 0.0
        %1221 = vmatpush2.msra.mxu0 0.0
        %1222 = vmatprep.subr.mxu0 0.0
        %1223 = vmatpush2.msra.mxu0 0.0
        %1224 = vmatprep.subr.mxu0 0.0
        %1225 = vmatpush2.msra.mxu0 0.0
        %1226 = vmatprep.mubr.f32.mxu0 0.0
        %1227 = vmatmul.mubr.f32.gmra.mxu0 %v1106
        %v1228 = vpop.f32.mrf.mxu0
        %v1229 = vadd.f32 %v1160, %v1228
        %v1230 = vpop.f32.mrf.mxu0
        %1231 = vmatprep.mubr.f32.mxu0 0.0
        %1232 = vmatmul.mubr.f32.gmra.mxu0 %v1107
        %v1233 = vpop.f32.mrf.mxu0
        %v1234 = vadd.f32 %v1160, %v1233
        %v1235 = vpop.f32.mrf.mxu0
        %1236 = vmatprep.mubr.f32.mxu0 0.0
        %1237 = vmatmul.mubr.f32.gmra.mxu0 %v1108
        %v1238 = vpop.f32.mrf.mxu0
        %v1239 = vadd.f32 %v1160, %v1238
        %v1240 = vpop.f32.mrf.mxu0
        %1241 = vmatprep.mubr.f32.mxu0 0.0
        %1242 = vmatmul.mubr.f32.gmra.mxu0 %v1109
        %v1243 = vpop.f32.mrf.mxu0
        %v1244 = vadd.f32 %v1160, %v1243
        %v1245 = vpop.f32.mrf.mxu0
        %1246 = vmatprep.mubr.f32.mxu0 0.0
        %1247 = vmatmul.mubr.f32.gmra.mxu0 %v1110
        %v1248 = vpop.f32.mrf.mxu0
        %v1249 = vadd.f32 %v1160, %v1248
        %v1250 = vpop.f32.mrf.mxu0
        %1251 = vmatprep.mubr.f32.mxu0 0.0
        %1252 = vmatmul.mubr.f32.gmra.mxu0 %v1111
        %v1253 = vpop.f32.mrf.mxu0
        %v1254 = vadd.f32 %v1160, %v1253
        %v1255 = vpop.f32.mrf.mxu0
        %1256 = vmatprep.mubr.f32.mxu0 0.0
        %1257 = vmatmul.mubr.f32.gmra.mxu0 %v1112
        %v1258 = vpop.f32.mrf.mxu0
        %v1259 = vadd.f32 %v1160, %v1258
        %v1260 = vpop.f32.mrf.mxu0
        %1261 = vmatprep.mubr.f32.mxu0 0.0
        %1262 = vmatmul.mubr.f32.gmra.mxu0 %v1113
        %v1263 = vpop.f32.mrf.mxu0
        %v1264 = vadd.f32 %v1160, %v1263
        %v1265 = vpop.f32.mrf.mxu0
        %1266 = vmatprep.mubr.f32.mxu0 0.0
        %1267 = vmatmul.mubr.f32.gmra.mxu0 %v1114
        %v1268 = vpop.f32.mrf.mxu0
        %v1269 = vadd.f32 %v1160, %v1268
        %v1270 = vpop.f32.mrf.mxu0
        %1271 = vmatprep.mubr.f32.mxu0 0.0
        %1272 = vmatmul.mubr.f32.gmra.mxu0 %v1115
        %v1273 = vpop.f32.mrf.mxu0
        %v1274 = vadd.f32 %v1160, %v1273
        %v1275 = vpop.f32.mrf.mxu0
        %1276 = vmatprep.mubr.f32.mxu0 0.0
        %1277 = vmatmul.mubr.f32.gmra.mxu0 %v1116
        %v1278 = vpop.f32.mrf.mxu0
        %v1279 = vadd.f32 %v1160, %v1278
        %v1280 = vpop.f32.mrf.mxu0
        %1281 = vmatprep.mubr.f32.mxu0 0.0
        %1282 = vmatmul.mubr.f32.gmra.mxu0 %v1117
        %v1283 = vpop.f32.mrf.mxu0
        %v1284 = vadd.f32 %v1160, %v1283
        %v1285 = vpop.f32.mrf.mxu0
        %1286 = vmatprep.mubr.f32.mxu0 0.0
        %1287 = vmatmul.mubr.f32.gmra.mxu0 %v1118
        %v1288 = vpop.f32.mrf.mxu0
        %v1289 = vadd.f32 %v1160, %v1288
        %v1290 = vpop.f32.mrf.mxu0
        %1291 = vmatprep.mubr.f32.mxu0 0.0
        %1292 = vmatmul.mubr.f32.gmra.mxu0 %v1119
        %v1293 = vpop.f32.mrf.mxu0
        %v1294 = vadd.f32 %v1160, %v1293
        %v1295 = vpop.f32.mrf.mxu0
        %1296 = vmatprep.mubr.f32.mxu0 0.0
        %1297 = vmatmul.mubr.f32.gmra.mxu0 %v1120
        %v1298 = vpop.f32.mrf.mxu0
        %v1299 = vadd.f32 %v1160, %v1298
        %v1300 = vpop.f32.mrf.mxu0
        %1301 = vmatprep.mubr.f32.mxu0 0.0
        %1302 = vmatmul.mubr.f32.gmra.mxu0 %v1121
        %v1303 = vpop.f32.mrf.mxu0
        %v1304 = vadd.f32 %v1160, %v1303
        %v1305 = vpop.f32.mrf.mxu0
        %1306 = vdwg.mxu0
        %v1307 = vxor.u32 %v1229, 2147483648
        %v1308 = vxor.u32 %v1234, 2147483648
        %v1309 = vxor.u32 %v1239, 2147483648
        %v1310 = vxor.u32 %v1244, 2147483648
        %v1311 = vxor.u32 %v1249, 2147483648
        %v1312 = vxor.u32 %v1254, 2147483648
        %v1313 = vxor.u32 %v1259, 2147483648
        %v1314 = vxor.u32 %v1264, 2147483648
        %v1315 = vxor.u32 %v1269, 2147483648
        %v1316 = vxor.u32 %v1274, 2147483648
        %v1317 = vxor.u32 %v1279, 2147483648
        %v1318 = vxor.u32 %v1284, 2147483648
        %v1319 = vxor.u32 %v1289, 2147483648
        %v1320 = vxor.u32 %v1294, 2147483648
        %v1321 = vxor.u32 %v1299, 2147483648
        %v1322 = vxor.u32 %v1304, 2147483648
        %v1323 = vmul.f32 %v1307, 1.442695
        %v1324 = vpow.pop %v1323
        %v1325 = vmul.f32 %v1308, 1.442695
        %v1326 = vpow.pop %v1325
        %v1327 = vmul.f32 %v1309, 1.442695
        %v1328 = vpow.pop %v1327
        %v1329 = vmul.f32 %v1310, 1.442695
        %v1330 = vpow.pop %v1329
        %v1331 = vmul.f32 %v1311, 1.442695
        %v1332 = vpow.pop %v1331
        %v1333 = vmul.f32 %v1312, 1.442695
        %v1334 = vpow.pop %v1333
        %v1335 = vmul.f32 %v1313, 1.442695
        %v1336 = vpow.pop %v1335
        %v1337 = vmul.f32 %v1314, 1.442695
        %v1338 = vpow.pop %v1337
        %v1339 = vmul.f32 %v1315, 1.442695
        %v1340 = vpow.pop %v1339
        %v1341 = vmul.f32 %v1316, 1.442695
        %v1342 = vpow.pop %v1341
        %v1343 = vmul.f32 %v1317, 1.442695
        %v1344 = vpow.pop %v1343
        %v1345 = vmul.f32 %v1318, 1.442695
        %v1346 = vpow.pop %v1345
        %v1347 = vmul.f32 %v1319, 1.442695
        %v1348 = vpow.pop %v1347
        %v1349 = vmul.f32 %v1320, 1.442695
        %v1350 = vpow.pop %v1349
        %v1351 = vmul.f32 %v1321, 1.442695
        %v1352 = vpow.pop %v1351
        %v1353 = vmul.f32 %v1322, 1.442695
        %v1354 = vpow.pop %v1353
        %v1355 = vadd.f32 %v1324, 1.0
        %v1356 = vadd.f32 %v1326, 1.0
        %v1357 = vadd.f32 %v1328, 1.0
        %v1358 = vadd.f32 %v1330, 1.0
        %v1359 = vadd.f32 %v1332, 1.0
        %v1360 = vadd.f32 %v1334, 1.0
        %v1361 = vadd.f32 %v1336, 1.0
        %v1362 = vadd.f32 %v1338, 1.0
        %v1363 = vadd.f32 %v1340, 1.0
        %v1364 = vadd.f32 %v1342, 1.0
        %v1365 = vadd.f32 %v1344, 1.0
        %v1366 = vadd.f32 %v1346, 1.0
        %v1367 = vadd.f32 %v1348, 1.0
        %v1368 = vadd.f32 %v1350, 1.0
        %v1369 = vadd.f32 %v1352, 1.0
        %v1370 = vadd.f32 %v1354, 1.0
        %v1371 = vrcp.pop %v1355
        %v1372 = vmul.f32 1.0, %v1371
        %v1373 = vrcp.pop %v1356
        %v1374 = vmul.f32 1.0, %v1373
        %v1375 = vrcp.pop %v1357
        %v1376 = vmul.f32 1.0, %v1375
        %v1377 = vrcp.pop %v1358
        %v1378 = vmul.f32 1.0, %v1377
        %v1379 = vrcp.pop %v1359
        %v1380 = vmul.f32 1.0, %v1379
        %v1381 = vrcp.pop %v1360
        %v1382 = vmul.f32 1.0, %v1381
        %v1383 = vrcp.pop %v1361
        %v1384 = vmul.f32 1.0, %v1383
        %v1385 = vrcp.pop %v1362
        %v1386 = vmul.f32 1.0, %v1385
        %v1387 = vrcp.pop %v1363
        %v1388 = vmul.f32 1.0, %v1387
        %v1389 = vrcp.pop %v1364
        %v1390 = vmul.f32 1.0, %v1389
        %v1391 = vrcp.pop %v1365
        %v1392 = vmul.f32 1.0, %v1391
        %v1393 = vrcp.pop %v1366
        %v1394 = vmul.f32 1.0, %v1393
        %v1395 = vrcp.pop %v1367
        %v1396 = vmul.f32 1.0, %v1395
        %v1397 = vrcp.pop %v1368
        %v1398 = vmul.f32 1.0, %v1397
        %v1399 = vrcp.pop %v1369
        %v1400 = vmul.f32 1.0, %v1399
        %v1401 = vrcp.pop %v1370
        %v1402 = vmul.f32 1.0, %v1401
        %v1403 = vmul.f32 %v1229, %v1372
        %v1404 = vmul.f32 %v1234, %v1374
        %v1405 = vmul.f32 %v1239, %v1376
        %v1406 = vmul.f32 %v1244, %v1378
        %v1407 = vmul.f32 %v1249, %v1380
        %v1408 = vmul.f32 %v1254, %v1382
        %v1409 = vmul.f32 %v1259, %v1384
        %v1410 = vmul.f32 %v1264, %v1386
        %v1411 = vmul.f32 %v1269, %v1388
        %v1412 = vmul.f32 %v1274, %v1390
        %v1413 = vmul.f32 %v1279, %v1392
        %v1414 = vmul.f32 %v1284, %v1394
        %v1415 = vmul.f32 %v1289, %v1396
        %v1416 = vmul.f32 %v1294, %v1398
        %v1417 = vmul.f32 %v1299, %v1400
        %v1418 = vmul.f32 %v1304, %v1402
        %v1419 = vld [vmem:[%s3] sm:$0xff]
        %v1420 = vld [vmem:[%s4] sm:$0x1]
        %v1422 = vlaneseq
        %v1423 = vshrl.u32 %v1422, 7
        %v1424 = vsub.s32 0, %v1423
        %v1425 = vrot.slane %v1420, %v1424
        %v1428 = vsel %vm637, %v1403, 0
        %v1431 = vsel %vm637, %v1404, 0
        %v1434 = vsel %vm637, %v1405, 0
        %v1437 = vsel %vm637, %v1406, 0
        %v1440 = vsel %vm637, %v1407, 0
        %v1443 = vsel %vm637, %v1408, 0
        %v1446 = vsel %vm637, %v1409, 0
        %v1449 = vsel %vm637, %v1410, 0
        %v1452 = vsel %vm637, %v1411, 0
        %v1455 = vsel %vm637, %v1412, 0
        %v1458 = vsel %vm637, %v1413, 0
        %v1461 = vsel %vm637, %v1414, 0
        %v1464 = vsel %vm637, %v1415, 0
        %v1467 = vsel %vm637, %v1416, 0
        %v1470 = vsel %vm637, %v1417, 0
        %v1473 = vsel %vm637, %v1418, 0
        %1475 = vmatprep.subr.mxu0 0.0
        %1476 = vmatpush1.msra.mxu0 0.0
        %1477 = vmatprep.subr.mxu0 0.0
        %1478 = vmatpush1.msra.mxu0 0.0
        %1479 = vmatprep.subr.mxu0 0.0
        %1480 = vmatpush1.msra.mxu0 0.0
        %1481 = vmatprep.subr.mxu0 0.0
        %1482 = vmatpush1.msra.mxu0 0.0
        %1483 = vmatprep.subr.mxu0 0.0
        %1484 = vmatpush1.msra.mxu0 0.0
        %1485 = vmatprep.subr.mxu0 0.0
        %1486 = vmatpush1.msra.mxu0 0.0
        %1487 = vmatprep.subr.mxu0 0.0
        %1488 = vmatpush1.msra.mxu0 0.0
        %1489 = vmatprep.subr.mxu0 0.0
        %1490 = vmatpush1.msra.mxu0 0.0
        %1491 = vmatprep.subr.mxu0 0.0
        %1492 = vmatpush1.msra.mxu0 0.0
        %1493 = vmatprep.subr.mxu0 0.0
        %1494 = vmatpush1.msra.mxu0 0.0
        %1495 = vmatprep.subr.mxu0 0.0
        %1496 = vmatpush1.msra.mxu0 0.0
        %1497 = vmatprep.subr.mxu0 0.0
        %1498 = vmatpush1.msra.mxu0 0.0
        %1499 = vmatprep.subr.mxu0 0.0
        %1500 = vmatpush1.msra.mxu0 0.0
        %1501 = vmatprep.subr.mxu0 0.0
        %1502 = vmatpush1.msra.mxu0 0.0
        %1503 = vmatprep.subr.mxu0 0.0
        %1504 = vmatpush1.msra.mxu0 0.0
        %1505 = vmatprep.subr.mxu0 0.0
        %1506 = vmatpush1.msra.mxu0 %v1419
        %1507 = vmatprep.subr.mxu0 0.0
        %1508 = vmatpush2.msra.mxu0 0.0
        %1509 = vmatprep.subr.mxu0 0.0
        %1510 = vmatpush2.msra.mxu0 0.0
        %1511 = vmatprep.subr.mxu0 0.0
        %1512 = vmatpush2.msra.mxu0 0.0
        %1513 = vmatprep.subr.mxu0 0.0
        %1514 = vmatpush2.msra.mxu0 0.0
        %1515 = vmatprep.subr.mxu0 0.0
        %1516 = vmatpush2.msra.mxu0 0.0
        %1517 = vmatprep.subr.mxu0 0.0
        %1518 = vmatpush2.msra.mxu0 0.0
        %1519 = vmatprep.subr.mxu0 0.0
        %1520 = vmatpush2.msra.mxu0 0.0
        %1521 = vmatprep.subr.mxu0 0.0
        %1522 = vmatpush2.msra.mxu0 0.0
        %1523 = vmatprep.subr.mxu0 0.0
        %1524 = vmatpush2.msra.mxu0 0.0
        %1525 = vmatprep.subr.mxu0 0.0
        %1526 = vmatpush2.msra.mxu0 0.0
        %1527 = vmatprep.subr.mxu0 0.0
        %1528 = vmatpush2.msra.mxu0 0.0
        %1529 = vmatprep.subr.mxu0 0.0
        %1530 = vmatpush2.msra.mxu0 0.0
        %1531 = vmatprep.subr.mxu0 0.0
        %1532 = vmatpush2.msra.mxu0 0.0
        %1533 = vmatprep.subr.mxu0 0.0
        %1534 = vmatpush2.msra.mxu0 0.0
        %1535 = vmatprep.subr.mxu0 0.0
        %1536 = vmatpush2.msra.mxu0 0.0
        %1537 = vmatprep.subr.mxu0 0.0
        %1538 = vmatpush2.msra.mxu0 0.0
        %1539 = vmatprep.mubr.f32.mxu0 0.0
        %1540 = vmatmul.mubr.f32.gmra.mxu0 %v1428
        %v1541 = vpop.f32.mrf.mxu0
        %v1542 = vadd.f32 %v1425, %v1541
        %v1543 = vpop.f32.mrf.mxu0
        %1544 = vmatprep.mubr.f32.mxu0 0.0
        %1545 = vmatmul.mubr.f32.gmra.mxu0 %v1431
        %v1546 = vpop.f32.mrf.mxu0
        %v1547 = vadd.f32 %v1425, %v1546
        %v1548 = vpop.f32.mrf.mxu0
        %1549 = vmatprep.mubr.f32.mxu0 0.0
        %1550 = vmatmul.mubr.f32.gmra.mxu0 %v1434
        %v1551 = vpop.f32.mrf.mxu0
        %v1552 = vadd.f32 %v1425, %v1551
        %v1553 = vpop.f32.mrf.mxu0
        %1554 = vmatprep.mubr.f32.mxu0 0.0
        %1555 = vmatmul.mubr.f32.gmra.mxu0 %v1437
        %v1556 = vpop.f32.mrf.mxu0
        %v1557 = vadd.f32 %v1425, %v1556
        %v1558 = vpop.f32.mrf.mxu0
        %1559 = vmatprep.mubr.f32.mxu0 0.0
        %1560 = vmatmul.mubr.f32.gmra.mxu0 %v1440
        %v1561 = vpop.f32.mrf.mxu0
        %v1562 = vadd.f32 %v1425, %v1561
        %v1563 = vpop.f32.mrf.mxu0
        %1564 = vmatprep.mubr.f32.mxu0 0.0
        %1565 = vmatmul.mubr.f32.gmra.mxu0 %v1443
        %v1566 = vpop.f32.mrf.mxu0
        %v1567 = vadd.f32 %v1425, %v1566
        %v1568 = vpop.f32.mrf.mxu0
        %1569 = vmatprep.mubr.f32.mxu0 0.0
        %1570 = vmatmul.mubr.f32.gmra.mxu0 %v1446
        %v1571 = vpop.f32.mrf.mxu0
        %v1572 = vadd.f32 %v1425, %v1571
        %v1573 = vpop.f32.mrf.mxu0
        %1574 = vmatprep.mubr.f32.mxu0 0.0
        %1575 = vmatmul.mubr.f32.gmra.mxu0 %v1449
        %v1576 = vpop.f32.mrf.mxu0
        %v1577 = vadd.f32 %v1425, %v1576
        %v1578 = vpop.f32.mrf.mxu0
        %1579 = vmatprep.mubr.f32.mxu0 0.0
        %1580 = vmatmul.mubr.f32.gmra.mxu0 %v1452
        %v1581 = vpop.f32.mrf.mxu0
        %v1582 = vadd.f32 %v1425, %v1581
        %v1583 = vpop.f32.mrf.mxu0
        %1584 = vmatprep.mubr.f32.mxu0 0.0
        %1585 = vmatmul.mubr.f32.gmra.mxu0 %v1455
        %v1586 = vpop.f32.mrf.mxu0
        %v1587 = vadd.f32 %v1425, %v1586
        %v1588 = vpop.f32.mrf.mxu0
        %1589 = vmatprep.mubr.f32.mxu0 0.0
        %1590 = vmatmul.mubr.f32.gmra.mxu0 %v1458
        %v1591 = vpop.f32.mrf.mxu0
        %v1592 = vadd.f32 %v1425, %v1591
        %v1593 = vpop.f32.mrf.mxu0
        %1594 = vmatprep.mubr.f32.mxu0 0.0
        %1595 = vmatmul.mubr.f32.gmra.mxu0 %v1461
        %v1596 = vpop.f32.mrf.mxu0
        %v1597 = vadd.f32 %v1425, %v1596
        %v1598 = vpop.f32.mrf.mxu0
        %1599 = vmatprep.mubr.f32.mxu0 0.0
        %1600 = vmatmul.mubr.f32.gmra.mxu0 %v1464
        %v1601 = vpop.f32.mrf.mxu0
        %v1602 = vadd.f32 %v1425, %v1601
        %v1603 = vpop.f32.mrf.mxu0
        %1604 = vmatprep.mubr.f32.mxu0 0.0
        %1605 = vmatmul.mubr.f32.gmra.mxu0 %v1467
        %v1606 = vpop.f32.mrf.mxu0
        %v1607 = vadd.f32 %v1425, %v1606
        %v1608 = vpop.f32.mrf.mxu0
        %1609 = vmatprep.mubr.f32.mxu0 0.0
        %1610 = vmatmul.mubr.f32.gmra.mxu0 %v1470
        %v1611 = vpop.f32.mrf.mxu0
        %v1612 = vadd.f32 %v1425, %v1611
        %v1613 = vpop.f32.mrf.mxu0
        %1614 = vmatprep.mubr.f32.mxu0 0.0
        %1615 = vmatmul.mubr.f32.gmra.mxu0 %v1473
        %v1616 = vpop.f32.mrf.mxu0
        %v1617 = vadd.f32 %v1425, %v1616
        %v1618 = vpop.f32.mrf.mxu0
        %1619 = vdwg.mxu0
        %v1620 = vsel %vm637, %v1542, -inf
        %v1621 = vsel %vm637, %v1547, -inf
        %v1622 = vsel %vm637, %v1552, -inf
        %v1623 = vsel %vm637, %v1557, -inf
        %v1624 = vsel %vm637, %v1562, -inf
        %v1625 = vmax.f32 %v1620, %v1624
        %v1626 = vsel %vm637, %v1567, -inf
        %v1627 = vmax.f32 %v1621, %v1626
        %v1628 = vsel %vm637, %v1572, -inf
        %v1629 = vmax.f32 %v1622, %v1628
        %v1630 = vsel %vm637, %v1577, -inf
        %v1631 = vmax.f32 %v1623, %v1630
        %v1632 = vsel %vm637, %v1582, -inf
        %v1633 = vmax.f32 %v1625, %v1632
        %v1634 = vsel %vm637, %v1587, -inf
        %v1635 = vmax.f32 %v1627, %v1634
        %v1636 = vsel %vm637, %v1592, -inf
        %v1637 = vmax.f32 %v1629, %v1636
        %v1638 = vsel %vm637, %v1597, -inf
        %v1639 = vmax.f32 %v1631, %v1638
        %v1640 = vsel %vm637, %v1602, -inf
        %v1641 = vmax.f32 %v1633, %v1640
        %v1642 = vsel %vm637, %v1607, -inf
        %v1643 = vmax.f32 %v1635, %v1642
        %v1644 = vsel %vm637, %v1612, -inf
        %v1645 = vmax.f32 %v1637, %v1644
        %v1646 = vsel %vm637, %v1617, -inf
        %v1647 = vmax.f32 %v1639, %v1646
        %v1648 = vmax.f32 %v1641, %v1643
        %v1649 = vmax.f32 %v1645, %v1647
        %v1650 = vmax.f32 %v1648, %v1649
        %v1651 = vrot.slane %v1650, 4
        %v1652 = vmax.f32 %v1650, %v1651
        %v1653 = vrot.slane %v1652, 2
        %v1654 = vmax.f32 %v1652, %v1653
        %v1655 = vrot.slane %v1654, 1
        %v1656 = vmax.f32 %v1654, %v1655
        %v1657 = vsub.f32 %v1542, %v1656
        %v1658 = vsub.f32 %v1547, %v1656
        %v1659 = vsub.f32 %v1552, %v1656
        %v1660 = vsub.f32 %v1557, %v1656
        %v1661 = vsub.f32 %v1562, %v1656
        %v1662 = vsub.f32 %v1567, %v1656
        %v1663 = vsub.f32 %v1572, %v1656
        %v1664 = vsub.f32 %v1577, %v1656
        %v1665 = vsub.f32 %v1582, %v1656
        %v1666 = vsub.f32 %v1587, %v1656
        %v1667 = vsub.f32 %v1592, %v1656
        %v1668 = vsub.f32 %v1597, %v1656
        %v1669 = vsub.f32 %v1602, %v1656
        %v1670 = vsub.f32 %v1607, %v1656
        %v1671 = vsub.f32 %v1612, %v1656
        %v1672 = vsub.f32 %v1617, %v1656
        %v1673 = vmul.f32 %v1657, 1.442695
        %v1674 = vpow.pop %v1673
        %v1675 = vmul.f32 %v1658, 1.442695
        %v1676 = vpow.pop %v1675
        %v1677 = vmul.f32 %v1659, 1.442695
        %v1678 = vpow.pop %v1677
        %v1679 = vmul.f32 %v1660, 1.442695
        %v1680 = vpow.pop %v1679
        %v1681 = vmul.f32 %v1661, 1.442695
        %v1682 = vpow.pop %v1681
        %v1683 = vmul.f32 %v1662, 1.442695
        %v1684 = vpow.pop %v1683
        %v1685 = vmul.f32 %v1663, 1.442695
        %v1686 = vpow.pop %v1685
        %v1687 = vmul.f32 %v1664, 1.442695
        %v1688 = vpow.pop %v1687
        %v1689 = vmul.f32 %v1665, 1.442695
        %v1690 = vpow.pop %v1689
        %v1691 = vmul.f32 %v1666, 1.442695
        %v1692 = vpow.pop %v1691
        %v1693 = vmul.f32 %v1667, 1.442695
        %v1694 = vpow.pop %v1693
        %v1695 = vmul.f32 %v1668, 1.442695
        %v1696 = vpow.pop %v1695
        %v1697 = vmul.f32 %v1669, 1.442695
        %v1698 = vpow.pop %v1697
        %v1699 = vmul.f32 %v1670, 1.442695
        %v1700 = vpow.pop %v1699
        %v1701 = vmul.f32 %v1671, 1.442695
        %v1702 = vpow.pop %v1701
        %v1703 = vmul.f32 %v1672, 1.442695
        %v1704 = vpow.pop %v1703
        %v1705 = vsel %vm637, %v1674, 0.0
        %v1706 = vsel %vm637, %v1676, 0.0
        %v1707 = vadd.f32 %v1705, %v1706
        %v1708 = vsel %vm637, %v1678, 0.0
        %v1709 = vadd.f32 %v1707, %v1708
        %v1710 = vsel %vm637, %v1680, 0.0
        %v1711 = vadd.f32 %v1709, %v1710
        %v1712 = vsel %vm637, %v1682, 0.0
        %v1713 = vadd.f32 %v1711, %v1712
        %v1714 = vsel %vm637, %v1684, 0.0
        %v1715 = vadd.f32 %v1713, %v1714
        %v1716 = vsel %vm637, %v1686, 0.0
        %v1717 = vadd.f32 %v1715, %v1716
        %v1718 = vsel %vm637, %v1688, 0.0
        %v1719 = vadd.f32 %v1717, %v1718
        %v1720 = vsel %vm637, %v1690, 0.0
        %v1721 = vadd.f32 %v1719, %v1720
        %v1722 = vsel %vm637, %v1692, 0.0
        %v1723 = vadd.f32 %v1721, %v1722
        %v1724 = vsel %vm637, %v1694, 0.0
        %v1725 = vadd.f32 %v1723, %v1724
        %v1726 = vsel %vm637, %v1696, 0.0
        %v1727 = vadd.f32 %v1725, %v1726
        %v1728 = vsel %vm637, %v1698, 0.0
        %v1729 = vadd.f32 %v1727, %v1728
        %v1730 = vsel %vm637, %v1700, 0.0
        %v1731 = vadd.f32 %v1729, %v1730
        %v1732 = vsel %vm637, %v1702, 0.0
        %v1733 = vadd.f32 %v1731, %v1732
        %v1734 = vsel %vm637, %v1704, 0.0
        %v1735 = vadd.f32 %v1733, %v1734
        %v1736 = vrot.slane %v1735, 4
        %v1737 = vadd.f32 %v1735, %v1736
        %v1738 = vrot.slane %v1737, 2
        %v1739 = vadd.f32 %v1737, %v1738
        %v1740 = vrot.slane %v1739, 1
        %v1741 = vadd.f32 %v1739, %v1740
        %v1742 = vrcp.pop %v1741
        %v1743 = vmul.f32 %v1674, %v1742
        %v1744 = vmul.f32 %v1676, %v1742
        %v1745 = vmul.f32 %v1678, %v1742
        %v1746 = vmul.f32 %v1680, %v1742
        %v1747 = vmul.f32 %v1682, %v1742
        %v1748 = vmul.f32 %v1684, %v1742
        %v1749 = vmul.f32 %v1686, %v1742
        %v1750 = vmul.f32 %v1688, %v1742
        %v1751 = vmul.f32 %v1690, %v1742
        %v1752 = vmul.f32 %v1692, %v1742
        %v1753 = vmul.f32 %v1694, %v1742
        %v1754 = vmul.f32 %v1696, %v1742
        %v1755 = vmul.f32 %v1698, %v1742
        %v1756 = vmul.f32 %v1700, %v1742
        %v1757 = vmul.f32 %v1702, %v1742
        %v1758 = vmul.f32 %v1704, %v1742
        %1759 = vxpose.xlu0.b32.start [1/16] %v1743, 128
        %1760 = vxpose.xlu0.b32.cont [2/16] %v1744, 128
        %1761 = vxpose.xlu0.b32.cont [3/16] %v1745, 128
        %1762 = vxpose.xlu0.b32.cont [4/16] %v1746, 128
        %1763 = vxpose.xlu0.b32.cont [5/16] %v1747, 128
        %1764 = vxpose.xlu0.b32.cont [6/16] %v1748, 128
        %1765 = vxpose.xlu0.b32.cont [7/16] %v1749, 128
        %1766 = vxpose.xlu0.b32.cont [8/16] %v1750, 128
        %1767 = vxpose.xlu0.b32.cont [9/16] %v1751, 128
        %1768 = vxpose.xlu0.b32.cont [10/16] %v1752, 128
        %1769 = vxpose.xlu0.b32.cont [11/16] %v1753, 128
        %1770 = vxpose.xlu0.b32.cont [12/16] %v1754, 128
        %1771 = vxpose.xlu0.b32.cont [13/16] %v1755, 128
        %1772 = vxpose.xlu0.b32.cont [14/16] %v1756, 128
        %1773 = vxpose.xlu0.b32.cont [15/16] %v1757, 128
        %1774 = vxpose.xlu0.b32.end [16/16] %v1758, 128
        %v1775 = vpop.trf.xlu0
        %v1776 = vpop.trf.xlu0
        %v1777 = vpop.trf.xlu0
        %v1778 = vpop.trf.xlu0
        %v1779 = vpop.trf.xlu0
        %v1780 = vpop.trf.xlu0
        %v1781 = vpop.trf.xlu0
        %v1782 = vpop.trf.xlu0
        %v1783 = vpop.trf.xlu0
        %v1784 = vpop.trf.xlu0
        %v1785 = vpop.trf.xlu0
        %v1786 = vpop.trf.xlu0
        %v1787 = vpop.trf.xlu0
        %v1788 = vpop.trf.xlu0
        %v1789 = vpop.trf.xlu0
        %v1790 = vpop.trf.xlu0
        %1791 = vmatprep.subr.mxu0 0.0
        %1792 = vmatpush1.msra.mxu0 %v1121
        %1793 = vmatprep.subr.mxu0 0.0
        %1794 = vmatpush1.msra.mxu0 %v1120
        %1795 = vmatprep.subr.mxu0 0.0
        %1796 = vmatpush1.msra.mxu0 %v1119
        %1797 = vmatprep.subr.mxu0 0.0
        %1798 = vmatpush1.msra.mxu0 %v1118
        %1799 = vmatprep.subr.mxu0 0.0
        %1800 = vmatpush1.msra.mxu0 %v1117
        %1801 = vmatprep.subr.mxu0 0.0
        %1802 = vmatpush1.msra.mxu0 %v1116
        %1803 = vmatprep.subr.mxu0 0.0
        %1804 = vmatpush1.msra.mxu0 %v1115
        %1805 = vmatprep.subr.mxu0 0.0
        %1806 = vmatpush1.msra.mxu0 %v1114
        %1807 = vmatprep.subr.mxu0 0.0
        %1808 = vmatpush1.msra.mxu0 %v1113
        %1809 = vmatprep.subr.mxu0 0.0
        %1810 = vmatpush1.msra.mxu0 %v1112
        %1811 = vmatprep.subr.mxu0 0.0
        %1812 = vmatpush1.msra.mxu0 %v1111
        %1813 = vmatprep.subr.mxu0 0.0
        %1814 = vmatpush1.msra.mxu0 %v1110
        %1815 = vmatprep.subr.mxu0 0.0
        %1816 = vmatpush1.msra.mxu0 %v1109
        %1817 = vmatprep.subr.mxu0 0.0
        %1818 = vmatpush1.msra.mxu0 %v1108
        %1819 = vmatprep.subr.mxu0 0.0
        %1820 = vmatpush1.msra.mxu0 %v1107
        %1821 = vmatprep.subr.mxu0 0.0
        %1822 = vmatpush1.msra.mxu0 %v1106
        %1823 = vmatprep.subr.mxu0 0.0
        %1824 = vmatpush2.msra.mxu0 0.0
        %1825 = vmatprep.subr.mxu0 0.0
        %1826 = vmatpush2.msra.mxu0 0.0
        %1827 = vmatprep.subr.mxu0 0.0
        %1828 = vmatpush2.msra.mxu0 0.0
        %1829 = vmatprep.subr.mxu0 0.0
        %1830 = vmatpush2.msra.mxu0 0.0
        %1831 = vmatprep.subr.mxu0 0.0
        %1832 = vmatpush2.msra.mxu0 0.0
        %1833 = vmatprep.subr.mxu0 0.0
        %1834 = vmatpush2.msra.mxu0 0.0
        %1835 = vmatprep.subr.mxu0 0.0
        %1836 = vmatpush2.msra.mxu0 0.0
        %1837 = vmatprep.subr.mxu0 0.0
        %1838 = vmatpush2.msra.mxu0 0.0
        %1839 = vmatprep.subr.mxu0 0.0
        %1840 = vmatpush2.msra.mxu0 0.0
        %1841 = vmatprep.subr.mxu0 0.0
        %1842 = vmatpush2.msra.mxu0 0.0
        %1843 = vmatprep.subr.mxu0 0.0
        %1844 = vmatpush2.msra.mxu0 0.0
        %1845 = vmatprep.subr.mxu0 0.0
        %1846 = vmatpush2.msra.mxu0 0.0
        %1847 = vmatprep.subr.mxu0 0.0
        %1848 = vmatpush2.msra.mxu0 0.0
        %1849 = vmatprep.subr.mxu0 0.0
        %1850 = vmatpush2.msra.mxu0 0.0
        %1851 = vmatprep.subr.mxu0 0.0
        %1852 = vmatpush2.msra.mxu0 0.0
        %1853 = vmatprep.subr.mxu0 0.0
        %1854 = vmatpush2.msra.mxu0 0.0
        %1855 = vmatprep.mubr.f32.mxu0 0.0
        %1856 = vmatmul.mubr.f32.gmra.mxu0 %v1775
        %v1857 = vpop.f32.mrf.mxu0
        %v1858 = vadd.f32 0.0, %v1857
        %v1859 = vpop.f32.mrf.mxu0
        %1860 = vdwg.mxu0
        %s1861 = scalar_lea.vmem %s274, 8 [#allocation5]
        %1862 = vst [vmem:[%s1861] sm:$0xff] %v1858
        %s1863 = sand.u32 %s145, 1
        %s1864 = scalar_lea.sflag [#allocation4], %s1863
        %s1865 = sand.u32 %s145, 1
        %s1866 = smul.addr %s1865, 16
        %s1867 = scalar_lea.vmem [#allocation5], %s1866
        %s1868 = sand.u32 %s171, 1
        %s1869 = scalar_lea.sflag [#allocation7], %s1868
        %s1870 = sand.u32 %s171, 1
        %s1871 = smul.addr %s1870, 256
        %s1872 = scalar_lea.vmem [#allocation6], %s1871
        // Predicated region
        $region45: #{tpu_custom_call.1} parent=39 // pred_check
          %p1873 = pneg %p155
        $region46: #{tpu_custom_call.1} parent=39 // pred_check_branch
          %1875 = sbr.rel (%p1873) target = $region48
        $region47: #{tpu_custom_call.1} parent=39 // pred_region
          %s1876 = smul.u32 2, %s27
          %s1878 = ssub.s32 256, 256
          %1879 = vsyncadd %s1864, %s1878
          %s1880 = smul.addr %s1876, 128
          %s1881 = scalar_lea.hbm %s5, %s1880
          %s1882 = sshll.u32 %s1867, 4
          %s1883 = int_to_ptr.vmem [resolvable:$true] %s1882
          %1888 = dma.vmem_to_hbm [thread:$0]  %s1883, 256, %s1881, %s1864, 128, 128, 8
        $region48: #{tpu_custom_call.1} parent=39 // pred_fallthru
          _
        // Predicated region
        $region49: #{tpu_custom_call.1} parent=39 // pred_check
          %p1889 = pneg %p181
        $region50: #{tpu_custom_call.1} parent=39 // pred_check_branch
          %1891 = sbr.rel (%p1889) target = $region52
        $region51: #{tpu_custom_call.1} parent=39 // pred_region
          %s1892 = smul.u32 2, %s27
          %s1894 = ssub.s32 4096, 4096
          %1895 = vsyncadd %s1869, %s1894
          %s1896 = smul.addr %s1892, 16
          %s1897 = smul.addr %s1896, 128
          %s1898 = scalar_lea.hbm %s6, %s1897
          %s1899 = sshll.u32 %s1872, 4
          %s1900 = int_to_ptr.vmem [resolvable:$true] %s1899
          %1905 = dma.vmem_to_hbm [thread:$0]  %s1900, 4096, %s1898, %s1869, 128, 128, 8
        $region52: #{tpu_custom_call.1} parent=39 // pred_fallthru
          _
      $region40: #{tpu_custom_call.1} parent=5 // pred_fallthru
        _
      %p1906 = scmp.le.s32.totalorder 2, %s22
      // Predicated region
      $region53: #{tpu_custom_call.1} parent=5 // pred_check
        %p1907 = pneg %p1906
      $region54: #{tpu_custom_call.1} parent=5 // pred_check_branch
        %1909 = sbr.rel (%p1907) target = $region56
      $region55: #{tpu_custom_call.1} parent=5 // pred_region
        %s1910 = ssub.s32 %s22, 2
        // Predicated region
        $region57: #{tpu_custom_call.1} parent=55 // pred_check
          %p1911 = pneg %p161
        $region58: #{tpu_custom_call.1} parent=55 // pred_check_branch
          %1913 = sbr.rel (%p1911) target = $region60
        $region59: #{tpu_custom_call.1} parent=55 // pred_region
          %s1914 = sand.u32 %s146, 1
          %s1915 = scalar_lea.sflag [#allocation4], %s1914
          %s1916 = sand.u32 %s146, 1
          %s1917 = smul.addr %s1916, 16
          %s1918 = scalar_lea.vmem [#allocation5], %s1917
          %1919 = dma.done %s1915, 256
        $region60: #{tpu_custom_call.1} parent=55 // pred_fallthru
          _
        // Predicated region
        $region61: #{tpu_custom_call.1} parent=55 // pred_check
          %p1920 = pneg %p187
        $region62: #{tpu_custom_call.1} parent=55 // pred_check_branch
          %1922 = sbr.rel (%p1920) target = $region64
        $region63: #{tpu_custom_call.1} parent=55 // pred_region
          %s1923 = sand.u32 %s172, 1
          %s1924 = scalar_lea.sflag [#allocation7], %s1923
          %s1925 = sand.u32 %s172, 1
          %s1926 = smul.addr %s1925, 256
          %s1927 = scalar_lea.vmem [#allocation6], %s1926
          %1928 = dma.done %s1924, 4096
        $region64: #{tpu_custom_call.1} parent=55 // pred_fallthru
          _
      $region56: #{tpu_custom_call.1} parent=5 // pred_fallthru
        _
    $region6: #{tpu_custom_call.1} parent=1 // loop_footer
      %s26 = sadd.s32 1, %s22
    $region7: #{tpu_custom_call.1} parent=1 // loop_footer_branch
      %21 = sbr.rel target = $region3
    $region8: #{tpu_custom_call.1} parent=1 // loop_exit
      _
    %1929 = vsyncpa [#allocation3], 1
    %s1930 = scalar_lea.sflag [#allocation3], 1
    %1931 = vsyncpa %s1930, 1
    %1932 = vsyncpa [#allocation4], 1
    %s1933 = scalar_lea.sflag [#allocation4], 1
    %1934 = vsyncpa %s1933, 1
    %1935 = vsyncpa [#allocation7], 1
    %s1936 = scalar_lea.sflag [#allocation7], 1
    %1937 = vsyncpa %s1936, 1

</llo_original>
